<compile_context>
chip_gen: v6e
topology: v6e:2x2x1
jax: 0.10.0
libtpu: 0.0.40
codegen_flags: <defaults>
</compile_context>

<pallas_src>
import jax
import jax.numpy as jnp
from jax import lax
from jax.experimental import pallas as pl
from jax.experimental.pallas import tpu as pltpu

HIDDEN = 32
FEATURES = 15          # "actual_input_size" hard-coded in the PyTorch module
LANE = 128
SUBLANE = 8


def _round_up(n, m):
    return ((n + m - 1) // m) * m


# ------------------------------- kernel --------------------------------------
def strategy_kernel(x_ref, w1_ref, b1_ref, w2_ref, b2_ref,
                    wih_ref, whh_ref, bihh_ref,
                    w3_ref, b3_ref, w4_ref, b4_ref,
                    out_ref, xg_ref):
    H = HIDDEN
    T, Bt, F = x_ref.shape            # time-major batch tile

    # ---------------- encoder: all timesteps fused into one matmul ----------
    # (T, Bt, F) -> (T*Bt, F) is a tile-aligned flatten because Bt % 8 == 0.
    x = x_ref[...].reshape(T * Bt, F)
    h1 = jnp.maximum(
        jnp.dot(x, w1_ref[...], preferred_element_type=jnp.float32) + b1_ref[...],
        0.0)
    enc = jnp.maximum(
        jnp.dot(h1, w2_ref[...], preferred_element_type=jnp.float32) + b2_ref[...],
        0.0)                                                     # (T*Bt, H)

    # ------ input-side LSTM gate projections, hoisted out of the recurrence --
    # One lane-dense (T*Bt, 32) @ (32, 128) matmul; bih+bhh folded in once.
    xg = (jnp.dot(enc, wih_ref[...], preferred_element_type=jnp.float32)
          + bihh_ref[...])                                       # (T*Bt, 4H)
    # Park the gate slabs in VMEM scratch, time-major: each step then reads a
    # sublane-aligned (Bt, 4H) tile instead of keeping the whole slab in vregs.
    xg_ref[...] = xg.reshape(T, Bt, 4 * H)

    whh = whh_ref[...]                                           # (H, 4H)

    # ---------------- LSTM: serial recurrence, only h/c/whh live -------------
    def step(t, carry):
        h, c = carry
        gates = xg_ref[t] + jnp.dot(h, whh,
                                    preferred_element_type=jnp.float32)  # (Bt, 4H)
        # Two full-vreg EUP launches per step instead of 4 quarter-vreg ones.
        sg = jax.nn.sigmoid(gates)
        tg = jnp.tanh(gates)
        i = sg[:, 0 * H:1 * H]
        f = sg[:, 1 * H:2 * H]
        g = tg[:, 2 * H:3 * H]
        o = sg[:, 3 * H:4 * H]
        c = f * c + i * g
        h = o * jnp.tanh(c)
        return h, c

    h0 = jnp.zeros((Bt, H), jnp.float32)
    c0 = jnp.zeros((Bt, H), jnp.float32)
    h, _ = lax.fori_loop(0, T, step, (h0, c0), unroll=min(T, 8))

    # ---------------- decoder on the final hidden state ----------------------
    d1 = jnp.maximum(
        jnp.dot(h, w3_ref[...], preferred_element_type=jnp.float32) + b3_ref[...],
        0.0)
    logits = (jnp.dot(d1, w4_ref[...], preferred_element_type=jnp.float32)
              + b4_ref[...])                                     # (Bt, out_pad)
    out_ref[...] = jax.nn.sigmoid(logits)      # unmasked, lane-dense store


# ------------------------------ wrapper ---------------------------------------
def prepare_params(params):
    """One-time parameter preparation, hoisted off the per-call dispatch path."""
    H = HIDDEN
    out_size = params["w4"].shape[1]
    out_pad = _round_up(out_size, LANE)
    w4p = jnp.zeros((H, out_pad), jnp.float32).at[:, :out_size].set(params["w4"])
    b4p = jnp.zeros((1, out_pad), jnp.float32).at[:, :out_size].set(params["b4"])
    return {
        "w1": params["w1"], "b1": params["b1"],
        "w2": params["w2"], "b2": params["b2"],
        "wih": params["wih"], "whh": params["whh"],
        "bihh": params["bih"] + params["bhh"],       # folded LSTM bias
        "w3": params["w3"], "b3": params["b3"],
        "w4p": w4p, "b4p": b4p,                      # lane-padded decoder head
        "out_size": out_size,
    }


def _pick_batch_tile(B, T):
    # Keep the per-tile gate slab (T*Bt*4H f32 = T*Bt*512 B) in the low-MiB
    # range so it sits well inside v7x's 32 MiB scoped / 64 MiB physical VMEM.
    rows_budget = 8192                               # -> gate slab <= 4 MiB
    bt = max(SUBLANE, min(256, rows_budget // max(T, 1)))
    bt = max(SUBLANE, (bt // SUBLANE) * SUBLANE)
    return min(bt, _round_up(B, SUBLANE))


def strategy_transformer_forward(x, prepped, *, batch_tile=None):
    """x: (B, T, 15) batch-first (PyTorch convention). Returns (B, output_size)."""
    B, T, F = x.shape
    assert F == FEATURES, f"expected {FEATURES} features, got {F}"
    H = HIDDEN
    out_size = prepped["out_size"]
    out_pad = prepped["w4p"].shape[1]

    Bt = batch_tile if batch_tile is not None else _pick_batch_tile(B, T)
    Bt = max(SUBLANE, _round_up(Bt, SUBLANE))
    B_pad = _round_up(B, Bt)

    # Time-major, batch-padded layout so each LSTM step reads a sublane-aligned
    # (Bt, 4H) tile.  (If the producer can emit x time-major, this per-call
    # transpose/pad of the small raw input disappears entirely.)
    x_tm = jnp.transpose(x, (1, 0, 2))               # (T, B, F)
    if B_pad != B:
        x_tm = jnp.pad(x_tm, ((0, 0), (0, B_pad - B), (0, 0)))

    grid = (B_pad // Bt,)
    const2 = lambda i: (0, 0)

    in_specs = [
        pl.BlockSpec((T, Bt, FEATURES), lambda i: (0, i, 0)),   # x tile (streamed)
        pl.BlockSpec((FEATURES, H), const2),                    # w1 (VMEM-resident)
        pl.BlockSpec((1, H), const2),                           # b1
        pl.BlockSpec((H, H), const2),                           # w2
        pl.BlockSpec((1, H), const2),                           # b2
        pl.BlockSpec((H, 4 * H), const2),                       # wih
        pl.BlockSpec((H, 4 * H), const2),                       # whh
        pl.BlockSpec((1, 4 * H), const2),                       # bih + bhh (folded)
        pl.BlockSpec((H, H), const2),                           # w3
        pl.BlockSpec((1, H), const2),                           # b3
        pl.BlockSpec((H, out_pad), const2),                     # w4 (lane-padded)
        pl.BlockSpec((1, out_pad), const2),                     # b4 (lane-padded)
    ]
    out_specs = pl.BlockSpec((Bt, out_pad), lambda i: (i, 0))

    # Explicit VMEM budget: x tile + gate-slab scratch + output tile, with
    # double-buffering / live-value headroom; clamped to the v7x reality.
    tile_bytes = 4 * (T * Bt * FEATURES + T * Bt * 4 * H + Bt * out_pad)
    vmem_limit = int(min(64 << 20, max(16 << 20, 6 * tile_bytes + (4 << 20))))

    grid_spec = pltpu.PrefetchScalarGridSpec(
        num_scalar_prefetch=0,
        grid=grid,
        in_specs=in_specs,
        out_specs=out_specs,
        scratch_shapes=[pltpu.VMEM((T, Bt, 4 * H), jnp.float32)],
    )

    out_padded = pl.pallas_call(
        strategy_kernel,
        out_shape=jax.ShapeDtypeStruct((B_pad, out_pad), jnp.float32),
        grid_spec=grid_spec,
        compiler_params=pltpu.CompilerParams(
            dimension_semantics=("parallel",),
            vmem_limit_bytes=vmem_limit),
    )(x_tm,
      prepped["w1"], prepped["b1"], prepped["w2"], prepped["b2"],
      prepped["wih"], prepped["whh"], prepped["bihh"],
      prepped["w3"], prepped["b3"], prepped["w4p"], prepped["b4p"])

    return out_padded[:B, :out_size]


# ------------------------- deterministic parameter init ----------------------
def _xavier(key, fan_out, fan_in):
    bound = (6.0 / (fan_in + fan_out)) ** 0.5
    # stored pre-transposed as (in, out) so the kernel computes x @ W
    return jax.random.uniform(key, (fan_in, fan_out), jnp.float32, -bound, bound)


def _bias(key, n, fan_in):
    bound = 1.0 / (fan_in ** 0.5)
    return jax.random.uniform(key, (1, n), jnp.float32, -bound, bound)


def init_params(key, output_size):
    H = HIDDEN
    ks = jax.random.split(key, 12)
    return {
        # encoder
        "w1": _xavier(ks[0], H, FEATURES), "b1": _bias(ks[1], H, FEATURES),
        "w2": _xavier(ks[2], H, H),        "b2": _bias(ks[3], H, H),
        # LSTM (PyTorch stacked gate order [i, f, g, o]) — (in, 4H)
        "wih": _xavier(ks[4], 4 * H, H), "whh": _xavier(ks[5], 4 * H, H),
        "bih": _bias(ks[6], 4 * H, H),   "bhh": _bias(ks[7], 4 * H, H),
        # decoder
        "w3": _xavier(ks[8], H, H),            "b3": _bias(ks[9], H, H),
        "w4": _xavier(ks[10], output_size, H), "b4": _bias(ks[11], output_size, H),
    }


# ---------------------------- pure-JAX reference ------------------------------
def _reference(x, p):
    B, T, F = x.shape
    H = HIDDEN
    h1 = jnp.maximum(x @ p["w1"] + p["b1"], 0.0)
    enc = jnp.maximum(h1 @ p["w2"] + p["b2"], 0.0)     # (B, T, H)
    h = jnp.zeros((B, H), jnp.float32)
    c = jnp.zeros((B, H), jnp.float32)
    for t in range(T):
        g = enc[:, t] @ p["wih"] + h @ p["whh"] + p["bih"] + p["bhh"]
        i = jax.nn.sigmoid(g[:, 0 * H:1 * H])
        f = jax.nn.sigmoid(g[:, 1 * H:2 * H])
        gg = jnp.tanh(g[:, 2 * H:3 * H])
        o = jax.nn.sigmoid(g[:, 3 * H:4 * H])
        c = f * c + i * gg
        h = o * jnp.tanh(c)
    d1 = jnp.maximum(h @ p["w3"] + p["b3"], 0.0)
    return jax.nn.sigmoid(d1 @ p["w4"] + p["b4"])


if __name__ == "__main__":
    B, T, OUT = 2, 8, 4
    key = jax.random.PRNGKey(0)
    k_x, k_p = jax.random.split(key)
    x = jax.random.normal(k_x, (B, T, FEATURES), jnp.float32)
    params = init_params(k_p, OUT)
    prepped = prepare_params(params)      # one-time: bias fold + lane-padded head

    out = strategy_transformer_forward(x, prepped)
    out = jax.block_until_ready(out)

    ref = _reference(x, params)
    assert out.shape == (B, OUT)
    assert jnp.allclose(out, ref, rtol=1e-3, atol=1e-3), (out, ref)
    print("KERNEL_OK")
</pallas_src>

<mosaic_0001>
module attributes {stable_mosaic.version = 11 : i64} {
  func.func @strategy_kernel(%arg0: i32, %arg1: memref<8x8x15xf32, #tpu.memory_space<vmem>>, %arg2: memref<15x32xf32, #tpu.memory_space<vmem>>, %arg3: memref<1x32xf32, #tpu.memory_space<vmem>>, %arg4: memref<32x32xf32, #tpu.memory_space<vmem>>, %arg5: memref<1x32xf32, #tpu.memory_space<vmem>>, %arg6: memref<32x128xf32, #tpu.memory_space<vmem>>, %arg7: memref<32x128xf32, #tpu.memory_space<vmem>>, %arg8: memref<1x128xf32, #tpu.memory_space<vmem>>, %arg9: memref<32x32xf32, #tpu.memory_space<vmem>>, %arg10: memref<1x32xf32, #tpu.memory_space<vmem>>, %arg11: memref<32x128xf32, #tpu.memory_space<vmem>>, %arg12: memref<1x128xf32, #tpu.memory_space<vmem>>, %arg13: memref<8x128xf32, #tpu.memory_space<vmem>>, %arg14: memref<8x8x128xf32, #tpu.memory_space<vmem>>) attributes {dimension_semantics = [#tpu.dimension_semantics<parallel>], iteration_bounds = array<i64: 1>, scalar_prefetch = 0 : i64, scratch_operands = 1 : i64, tpu.core_type = #tpu.core_type<tc>, window_params = [{transform_indices = @transform_0, window_bounds = array<i64: 8, 8, 15>}, {pipeline_mode = #tpu.pipeline_mode<synchronous>, transform_indices = @transform_1, window_bounds = array<i64: 15, 32>}, {pipeline_mode = #tpu.pipeline_mode<synchronous>, transform_indices = @transform_2, window_bounds = array<i64: 1, 32>}, {pipeline_mode = #tpu.pipeline_mode<synchronous>, transform_indices = @transform_3, window_bounds = array<i64: 32, 32>}, {pipeline_mode = #tpu.pipeline_mode<synchronous>, transform_indices = @transform_4, window_bounds = array<i64: 1, 32>}, {pipeline_mode = #tpu.pipeline_mode<synchronous>, transform_indices = @transform_5, window_bounds = array<i64: 32, 128>}, {pipeline_mode = #tpu.pipeline_mode<synchronous>, transform_indices = @transform_6, window_bounds = array<i64: 32, 128>}, {pipeline_mode = #tpu.pipeline_mode<synchronous>, transform_indices = @transform_7, window_bounds = array<i64: 1, 128>}, {pipeline_mode = #tpu.pipeline_mode<synchronous>, transform_indices = @transform_8, window_bounds = array<i64: 32, 32>}, {pipeline_mode = #tpu.pipeline_mode<synchronous>, transform_indices = @transform_9, window_bounds = array<i64: 1, 32>}, {pipeline_mode = #tpu.pipeline_mode<synchronous>, transform_indices = @transform_10, window_bounds = array<i64: 32, 128>}, {pipeline_mode = #tpu.pipeline_mode<synchronous>, transform_indices = @transform_11, window_bounds = array<i64: 1, 128>}, {transform_indices = @transform_12, window_bounds = array<i64: 8, 128>}]} {
    %c0 = arith.constant 0 : index
    %c0_0 = arith.constant 0 : index
    %c0_1 = arith.constant 0 : index
    %0 = vector.load %arg1[%c0, %c0_0, %c0_1] : memref<8x8x15xf32, #tpu.memory_space<vmem>>, vector<8x8x15xf32>
    %1 = vector.shape_cast %0 : vector<8x8x15xf32> to vector<64x15xf32>
    %c0_2 = arith.constant 0 : index
    %c0_3 = arith.constant 0 : index
    %2 = vector.load %arg2[%c0_2, %c0_3] : memref<15x32xf32, #tpu.memory_space<vmem>>, vector<15x32xf32>
    %cst = arith.constant dense<0.000000e+00> : vector<64x32xf32>
    %3 = tpu.matmul %1, %2, %cst {dimension_numbers = #tpu.dot_dimension_numbers<[1], [0], [0], [1], [0, 0, 1, 1], [], []>} : vector<64x15xf32>, vector<15x32xf32>, vector<64x32xf32> -> vector<64x32xf32>
    %c0_4 = arith.constant 0 : index
    %c0_5 = arith.constant 0 : index
    %4 = vector.load %arg3[%c0_4, %c0_5] : memref<1x32xf32, #tpu.memory_space<vmem>>, vector<1x32xf32>
    %5 = vector.broadcast %4 : vector<1x32xf32> to vector<64x32xf32>
    %6 = arith.addf %3, %5 : vector<64x32xf32>
    %cst_6 = arith.constant 0.000000e+00 : f32
    %7 = vector.broadcast %cst_6 : f32 to vector<64x32xf32>
    %8 = arith.maximumf %6, %7 : vector<64x32xf32>
    %c0_7 = arith.constant 0 : index
    %c0_8 = arith.constant 0 : index
    %9 = vector.load %arg4[%c0_7, %c0_8] : memref<32x32xf32, #tpu.memory_space<vmem>>, vector<32x32xf32>
    %cst_9 = arith.constant dense<0.000000e+00> : vector<64x32xf32>
    %10 = tpu.matmul %8, %9, %cst_9 {dimension_numbers = #tpu.dot_dimension_numbers<[1], [0], [0], [1], [0, 0, 1, 1], [], []>} : vector<64x32xf32>, vector<32x32xf32>, vector<64x32xf32> -> vector<64x32xf32>
    %c0_10 = arith.constant 0 : index
    %c0_11 = arith.constant 0 : index
    %11 = vector.load %arg5[%c0_10, %c0_11] : memref<1x32xf32, #tpu.memory_space<vmem>>, vector<1x32xf32>
    %12 = vector.broadcast %11 : vector<1x32xf32> to vector<64x32xf32>
    %13 = arith.addf %10, %12 : vector<64x32xf32>
    %cst_12 = arith.constant 0.000000e+00 : f32
    %14 = vector.broadcast %cst_12 : f32 to vector<64x32xf32>
    %15 = arith.maximumf %13, %14 : vector<64x32xf32>
    %c0_13 = arith.constant 0 : index
    %c0_14 = arith.constant 0 : index
    %16 = vector.load %arg6[%c0_13, %c0_14] : memref<32x128xf32, #tpu.memory_space<vmem>>, vector<32x128xf32>
    %cst_15 = arith.constant dense<0.000000e+00> : vector<64x128xf32>
    %17 = tpu.matmul %15, %16, %cst_15 {dimension_numbers = #tpu.dot_dimension_numbers<[1], [0], [0], [1], [0, 0, 1, 1], [], []>} : vector<64x32xf32>, vector<32x128xf32>, vector<64x128xf32> -> vector<64x128xf32>
    %c0_16 = arith.constant 0 : index
    %c0_17 = arith.constant 0 : index
    %18 = vector.load %arg8[%c0_16, %c0_17] : memref<1x128xf32, #tpu.memory_space<vmem>>, vector<1x128xf32>
    %19 = vector.broadcast %18 : vector<1x128xf32> to vector<64x128xf32>
    %20 = arith.addf %17, %19 : vector<64x128xf32>
    %21 = vector.shape_cast %20 : vector<64x128xf32> to vector<8x8x128xf32>
    %c0_18 = arith.constant 0 : index
    %c0_19 = arith.constant 0 : index
    %c0_20 = arith.constant 0 : index
    %22 = vector.load %arg14[%c0_18, %c0_19, %c0_20] : memref<8x8x128xf32, #tpu.memory_space<vmem>>, vector<8x8x128xf32>
    tpu.vector_store %arg14[%c0_18, %c0_19, %c0_20], %21 {strides = array<i32>} : memref<8x8x128xf32, #tpu.memory_space<vmem>>, vector<8x8x128xf32>,
    %c0_21 = arith.constant 0 : index
    %c0_22 = arith.constant 0 : index
    %23 = vector.load %arg7[%c0_21, %c0_22] : memref<32x128xf32, #tpu.memory_space<vmem>>, vector<32x128xf32>
    %cst_23 = arith.constant 0.000000e+00 : f32
    %24 = vector.broadcast %cst_23 : f32 to vector<8x32xf32>
    %cst_24 = arith.constant 0.000000e+00 : f32
    %25 = vector.broadcast %cst_24 : f32 to vector<8x32xf32>
    %c0_i32 = arith.constant 0 : i32
    %26 = arith.index_cast %c0_i32 : i32 to index
    %c0_25 = arith.constant 0 : index
    %c0_26 = arith.constant 0 : index
    %27 = vector.load %arg14[%26, %c0_25, %c0_26] : memref<8x8x128xf32, #tpu.memory_space<vmem>>, vector<1x8x128xf32>
    %28 = vector.shape_cast %27 : vector<1x8x128xf32> to vector<8x128xf32>
    %cst_27 = arith.constant dense<0.000000e+00> : vector<8x128xf32>
    %29 = tpu.matmul %24, %23, %cst_27 {dimension_numbers = #tpu.dot_dimension_numbers<[1], [0], [0], [1], [0, 0, 1, 1], [], []>} : vector<8x32xf32>, vector<32x128xf32>, vector<8x128xf32> -> vector<8x128xf32>
    %30 = arith.addf %28, %29 : vector<8x128xf32>
    %31 = arith.negf %30 : vector<8x128xf32>
    %32 = math.exp %31 : vector<8x128xf32>
    %cst_28 = arith.constant 1.000000e+00 : f32
    %33 = vector.broadcast %cst_28 : f32 to vector<8x128xf32>
    %34 = arith.addf %33, %32 : vector<8x128xf32>
    %35 = arith.divf %33, %34 : vector<8x128xf32>
    %36 = math.tanh %30 : vector<8x128xf32>
    %37 = vector.extract_strided_slice %35 {offsets = [0, 0], sizes = [8, 32], strides = [1, 1]} : vector<8x128xf32> to vector<8x32xf32>
    %38 = vector.extract_strided_slice %35 {offsets = [0, 32], sizes = [8, 32], strides = [1, 1]} : vector<8x128xf32> to vector<8x32xf32>
    %39 = vector.extract_strided_slice %36 {offsets = [0, 64], sizes = [8, 32], strides = [1, 1]} : vector<8x128xf32> to vector<8x32xf32>
    %40 = vector.extract_strided_slice %35 {offsets = [0, 96], sizes = [8, 32], strides = [1, 1]} : vector<8x128xf32> to vector<8x32xf32>
    %41 = arith.mulf %38, %25 : vector<8x32xf32>
    %42 = arith.mulf %37, %39 : vector<8x32xf32>
    %43 = arith.addf %41, %42 : vector<8x32xf32>
    %44 = math.tanh %43 : vector<8x32xf32>
    %45 = arith.mulf %40, %44 : vector<8x32xf32>
    %c1_i32 = arith.constant 1 : i32
    %46 = arith.index_cast %c1_i32 : i32 to index
    %c0_29 = arith.constant 0 : index
    %c0_30 = arith.constant 0 : index
    %47 = vector.load %arg14[%46, %c0_29, %c0_30] : memref<8x8x128xf32, #tpu.memory_space<vmem>>, vector<1x8x128xf32>
    %48 = vector.shape_cast %47 : vector<1x8x128xf32> to vector<8x128xf32>
    %cst_31 = arith.constant dense<0.000000e+00> : vector<8x128xf32>
    %49 = tpu.matmul %45, %23, %cst_31 {dimension_numbers = #tpu.dot_dimension_numbers<[1], [0], [0], [1], [0, 0, 1, 1], [], []>} : vector<8x32xf32>, vector<32x128xf32>, vector<8x128xf32> -> vector<8x128xf32>
    %50 = arith.addf %48, %49 : vector<8x128xf32>
    %51 = arith.negf %50 : vector<8x128xf32>
    %52 = math.exp %51 : vector<8x128xf32>
    %cst_32 = arith.constant 1.000000e+00 : f32
    %53 = vector.broadcast %cst_32 : f32 to vector<8x128xf32>
    %54 = arith.addf %53, %52 : vector<8x128xf32>
    %55 = arith.divf %53, %54 : vector<8x128xf32>
    %56 = math.tanh %50 : vector<8x128xf32>
    %57 = vector.extract_strided_slice %55 {offsets = [0, 0], sizes = [8, 32], strides = [1, 1]} : vector<8x128xf32> to vector<8x32xf32>
    %58 = vector.extract_strided_slice %55 {offsets = [0, 32], sizes = [8, 32], strides = [1, 1]} : vector<8x128xf32> to vector<8x32xf32>
    %59 = vector.extract_strided_slice %56 {offsets = [0, 64], sizes = [8, 32], strides = [1, 1]} : vector<8x128xf32> to vector<8x32xf32>
    %60 = vector.extract_strided_slice %55 {offsets = [0, 96], sizes = [8, 32], strides = [1, 1]} : vector<8x128xf32> to vector<8x32xf32>
    %61 = arith.mulf %58, %43 : vector<8x32xf32>
    %62 = arith.mulf %57, %59 : vector<8x32xf32>
    %63 = arith.addf %61, %62 : vector<8x32xf32>
    %64 = math.tanh %63 : vector<8x32xf32>
    %65 = arith.mulf %60, %64 : vector<8x32xf32>
    %c2_i32 = arith.constant 2 : i32
    %66 = arith.index_cast %c2_i32 : i32 to index
    %c0_33 = arith.constant 0 : index
    %c0_34 = arith.constant 0 : index
    %67 = vector.load %arg14[%66, %c0_33, %c0_34] : memref<8x8x128xf32, #tpu.memory_space<vmem>>, vector<1x8x128xf32>
    %68 = vector.shape_cast %67 : vector<1x8x128xf32> to vector<8x128xf32>
    %cst_35 = arith.constant dense<0.000000e+00> : vector<8x128xf32>
    %69 = tpu.matmul %65, %23, %cst_35 {dimension_numbers = #tpu.dot_dimension_numbers<[1], [0], [0], [1], [0, 0, 1, 1], [], []>} : vector<8x32xf32>, vector<32x128xf32>, vector<8x128xf32> -> vector<8x128xf32>
    %70 = arith.addf %68, %69 : vector<8x128xf32>
    %71 = arith.negf %70 : vector<8x128xf32>
    %72 = math.exp %71 : vector<8x128xf32>
    %cst_36 = arith.constant 1.000000e+00 : f32
    %73 = vector.broadcast %cst_36 : f32 to vector<8x128xf32>
    %74 = arith.addf %73, %72 : vector<8x128xf32>
    %75 = arith.divf %73, %74 : vector<8x128xf32>
    %76 = math.tanh %70 : vector<8x128xf32>
    %77 = vector.extract_strided_slice %75 {offsets = [0, 0], sizes = [8, 32], strides = [1, 1]} : vector<8x128xf32> to vector<8x32xf32>
    %78 = vector.extract_strided_slice %75 {offsets = [0, 32], sizes = [8, 32], strides = [1, 1]} : vector<8x128xf32> to vector<8x32xf32>
    %79 = vector.extract_strided_slice %76 {offsets = [0, 64], sizes = [8, 32], strides = [1, 1]} : vector<8x128xf32> to vector<8x32xf32>
    %80 = vector.extract_strided_slice %75 {offsets = [0, 96], sizes = [8, 32], strides = [1, 1]} : vector<8x128xf32> to vector<8x32xf32>
    %81 = arith.mulf %78, %63 : vector<8x32xf32>
    %82 = arith.mulf %77, %79 : vector<8x32xf32>
    %83 = arith.addf %81, %82 : vector<8x32xf32>
    %84 = math.tanh %83 : vector<8x32xf32>
    %85 = arith.mulf %80, %84 : vector<8x32xf32>
    %c3_i32 = arith.constant 3 : i32
    %86 = arith.index_cast %c3_i32 : i32 to index
    %c0_37 = arith.constant 0 : index
    %c0_38 = arith.constant 0 : index
    %87 = vector.load %arg14[%86, %c0_37, %c0_38] : memref<8x8x128xf32, #tpu.memory_space<vmem>>, vector<1x8x128xf32>
    %88 = vector.shape_cast %87 : vector<1x8x128xf32> to vector<8x128xf32>
    %cst_39 = arith.constant dense<0.000000e+00> : vector<8x128xf32>
    %89 = tpu.matmul %85, %23, %cst_39 {dimension_numbers = #tpu.dot_dimension_numbers<[1], [0], [0], [1], [0, 0, 1, 1], [], []>} : vector<8x32xf32>, vector<32x128xf32>, vector<8x128xf32> -> vector<8x128xf32>
    %90 = arith.addf %88, %89 : vector<8x128xf32>
    %91 = arith.negf %90 : vector<8x128xf32>
    %92 = math.exp %91 : vector<8x128xf32>
    %cst_40 = arith.constant 1.000000e+00 : f32
    %93 = vector.broadcast %cst_40 : f32 to vector<8x128xf32>
    %94 = arith.addf %93, %92 : vector<8x128xf32>
    %95 = arith.divf %93, %94 : vector<8x128xf32>
    %96 = math.tanh %90 : vector<8x128xf32>
    %97 = vector.extract_strided_slice %95 {offsets = [0, 0], sizes = [8, 32], strides = [1, 1]} : vector<8x128xf32> to vector<8x32xf32>
    %98 = vector.extract_strided_slice %95 {offsets = [0, 32], sizes = [8, 32], strides = [1, 1]} : vector<8x128xf32> to vector<8x32xf32>
    %99 = vector.extract_strided_slice %96 {offsets = [0, 64], sizes = [8, 32], strides = [1, 1]} : vector<8x128xf32> to vector<8x32xf32>
    %100 = vector.extract_strided_slice %95 {offsets = [0, 96], sizes = [8, 32], strides = [1, 1]} : vector<8x128xf32> to vector<8x32xf32>
    %101 = arith.mulf %98, %83 : vector<8x32xf32>
    %102 = arith.mulf %97, %99 : vector<8x32xf32>
    %103 = arith.addf %101, %102 : vector<8x32xf32>
    %104 = math.tanh %103 : vector<8x32xf32>
    %105 = arith.mulf %100, %104 : vector<8x32xf32>
    %c4_i32 = arith.constant 4 : i32
    %106 = arith.index_cast %c4_i32 : i32 to index
    %c0_41 = arith.constant 0 : index
    %c0_42 = arith.constant 0 : index
    %107 = vector.load %arg14[%106, %c0_41, %c0_42] : memref<8x8x128xf32, #tpu.memory_space<vmem>>, vector<1x8x128xf32>
    %108 = vector.shape_cast %107 : vector<1x8x128xf32> to vector<8x128xf32>
    %cst_43 = arith.constant dense<0.000000e+00> : vector<8x128xf32>
    %109 = tpu.matmul %105, %23, %cst_43 {dimension_numbers = #tpu.dot_dimension_numbers<[1], [0], [0], [1], [0, 0, 1, 1], [], []>} : vector<8x32xf32>, vector<32x128xf32>, vector<8x128xf32> -> vector<8x128xf32>
    %110 = arith.addf %108, %109 : vector<8x128xf32>
    %111 = arith.negf %110 : vector<8x128xf32>
    %112 = math.exp %111 : vector<8x128xf32>
    %cst_44 = arith.constant 1.000000e+00 : f32
    %113 = vector.broadcast %cst_44 : f32 to vector<8x128xf32>
    %114 = arith.addf %113, %112 : vector<8x128xf32>
    %115 = arith.divf %113, %114 : vector<8x128xf32>
    %116 = math.tanh %110 : vector<8x128xf32>
    %117 = vector.extract_strided_slice %115 {offsets = [0, 0], sizes = [8, 32], strides = [1, 1]} : vector<8x128xf32> to vector<8x32xf32>
    %118 = vector.extract_strided_slice %115 {offsets = [0, 32], sizes = [8, 32], strides = [1, 1]} : vector<8x128xf32> to vector<8x32xf32>
    %119 = vector.extract_strided_slice %116 {offsets = [0, 64], sizes = [8, 32], strides = [1, 1]} : vector<8x128xf32> to vector<8x32xf32>
    %120 = vector.extract_strided_slice %115 {offsets = [0, 96], sizes = [8, 32], strides = [1, 1]} : vector<8x128xf32> to vector<8x32xf32>
    %121 = arith.mulf %118, %103 : vector<8x32xf32>
    %122 = arith.mulf %117, %119 : vector<8x32xf32>
    %123 = arith.addf %121, %122 : vector<8x32xf32>
    %124 = math.tanh %123 : vector<8x32xf32>
    %125 = arith.mulf %120, %124 : vector<8x32xf32>
    %c5_i32 = arith.constant 5 : i32
    %126 = arith.index_cast %c5_i32 : i32 to index
    %c0_45 = arith.constant 0 : index
    %c0_46 = arith.constant 0 : index
    %127 = vector.load %arg14[%126, %c0_45, %c0_46] : memref<8x8x128xf32, #tpu.memory_space<vmem>>, vector<1x8x128xf32>
    %128 = vector.shape_cast %127 : vector<1x8x128xf32> to vector<8x128xf32>
    %cst_47 = arith.constant dense<0.000000e+00> : vector<8x128xf32>
    %129 = tpu.matmul %125, %23, %cst_47 {dimension_numbers = #tpu.dot_dimension_numbers<[1], [0], [0], [1], [0, 0, 1, 1], [], []>} : vector<8x32xf32>, vector<32x128xf32>, vector<8x128xf32> -> vector<8x128xf32>
    %130 = arith.addf %128, %129 : vector<8x128xf32>
    %131 = arith.negf %130 : vector<8x128xf32>
    %132 = math.exp %131 : vector<8x128xf32>
    %cst_48 = arith.constant 1.000000e+00 : f32
    %133 = vector.broadcast %cst_48 : f32 to vector<8x128xf32>
    %134 = arith.addf %133, %132 : vector<8x128xf32>
    %135 = arith.divf %133, %134 : vector<8x128xf32>
    %136 = math.tanh %130 : vector<8x128xf32>
    %137 = vector.extract_strided_slice %135 {offsets = [0, 0], sizes = [8, 32], strides = [1, 1]} : vector<8x128xf32> to vector<8x32xf32>
    %138 = vector.extract_strided_slice %135 {offsets = [0, 32], sizes = [8, 32], strides = [1, 1]} : vector<8x128xf32> to vector<8x32xf32>
    %139 = vector.extract_strided_slice %136 {offsets = [0, 64], sizes = [8, 32], strides = [1, 1]} : vector<8x128xf32> to vector<8x32xf32>
    %140 = vector.extract_strided_slice %135 {offsets = [0, 96], sizes = [8, 32], strides = [1, 1]} : vector<8x128xf32> to vector<8x32xf32>
    %141 = arith.mulf %138, %123 : vector<8x32xf32>
    %142 = arith.mulf %137, %139 : vector<8x32xf32>
    %143 = arith.addf %141, %142 : vector<8x32xf32>
    %144 = math.tanh %143 : vector<8x32xf32>
    %145 = arith.mulf %140, %144 : vector<8x32xf32>
    %c6_i32 = arith.constant 6 : i32
    %146 = arith.index_cast %c6_i32 : i32 to index
    %c0_49 = arith.constant 0 : index
    %c0_50 = arith.constant 0 : index
    %147 = vector.load %arg14[%146, %c0_49, %c0_50] : memref<8x8x128xf32, #tpu.memory_space<vmem>>, vector<1x8x128xf32>
    %148 = vector.shape_cast %147 : vector<1x8x128xf32> to vector<8x128xf32>
    %cst_51 = arith.constant dense<0.000000e+00> : vector<8x128xf32>
    %149 = tpu.matmul %145, %23, %cst_51 {dimension_numbers = #tpu.dot_dimension_numbers<[1], [0], [0], [1], [0, 0, 1, 1], [], []>} : vector<8x32xf32>, vector<32x128xf32>, vector<8x128xf32> -> vector<8x128xf32>
    %150 = arith.addf %148, %149 : vector<8x128xf32>
    %151 = arith.negf %150 : vector<8x128xf32>
    %152 = math.exp %151 : vector<8x128xf32>
    %cst_52 = arith.constant 1.000000e+00 : f32
    %153 = vector.broadcast %cst_52 : f32 to vector<8x128xf32>
    %154 = arith.addf %153, %152 : vector<8x128xf32>
    %155 = arith.divf %153, %154 : vector<8x128xf32>
    %156 = math.tanh %150 : vector<8x128xf32>
    %157 = vector.extract_strided_slice %155 {offsets = [0, 0], sizes = [8, 32], strides = [1, 1]} : vector<8x128xf32> to vector<8x32xf32>
    %158 = vector.extract_strided_slice %155 {offsets = [0, 32], sizes = [8, 32], strides = [1, 1]} : vector<8x128xf32> to vector<8x32xf32>
    %159 = vector.extract_strided_slice %156 {offsets = [0, 64], sizes = [8, 32], strides = [1, 1]} : vector<8x128xf32> to vector<8x32xf32>
    %160 = vector.extract_strided_slice %155 {offsets = [0, 96], sizes = [8, 32], strides = [1, 1]} : vector<8x128xf32> to vector<8x32xf32>
    %161 = arith.mulf %158, %143 : vector<8x32xf32>
    %162 = arith.mulf %157, %159 : vector<8x32xf32>
    %163 = arith.addf %161, %162 : vector<8x32xf32>
    %164 = math.tanh %163 : vector<8x32xf32>
    %165 = arith.mulf %160, %164 : vector<8x32xf32>
    %c7_i32 = arith.constant 7 : i32
    %166 = arith.index_cast %c7_i32 : i32 to index
    %c0_53 = arith.constant 0 : index
    %c0_54 = arith.constant 0 : index
    %167 = vector.load %arg14[%166, %c0_53, %c0_54] : memref<8x8x128xf32, #tpu.memory_space<vmem>>, vector<1x8x128xf32>
    %168 = vector.shape_cast %167 : vector<1x8x128xf32> to vector<8x128xf32>
    %cst_55 = arith.constant dense<0.000000e+00> : vector<8x128xf32>
    %169 = tpu.matmul %165, %23, %cst_55 {dimension_numbers = #tpu.dot_dimension_numbers<[1], [0], [0], [1], [0, 0, 1, 1], [], []>} : vector<8x32xf32>, vector<32x128xf32>, vector<8x128xf32> -> vector<8x128xf32>
    %170 = arith.addf %168, %169 : vector<8x128xf32>
    %171 = arith.negf %170 : vector<8x128xf32>
    %172 = math.exp %171 : vector<8x128xf32>
    %cst_56 = arith.constant 1.000000e+00 : f32
    %173 = vector.broadcast %cst_56 : f32 to vector<8x128xf32>
    %174 = arith.addf %173, %172 : vector<8x128xf32>
    %175 = arith.divf %173, %174 : vector<8x128xf32>
    %176 = math.tanh %170 : vector<8x128xf32>
    %177 = vector.extract_strided_slice %175 {offsets = [0, 0], sizes = [8, 32], strides = [1, 1]} : vector<8x128xf32> to vector<8x32xf32>
    %178 = vector.extract_strided_slice %175 {offsets = [0, 32], sizes = [8, 32], strides = [1, 1]} : vector<8x128xf32> to vector<8x32xf32>
    %179 = vector.extract_strided_slice %176 {offsets = [0, 64], sizes = [8, 32], strides = [1, 1]} : vector<8x128xf32> to vector<8x32xf32>
    %180 = vector.extract_strided_slice %175 {offsets = [0, 96], sizes = [8, 32], strides = [1, 1]} : vector<8x128xf32> to vector<8x32xf32>
    %181 = arith.mulf %178, %163 : vector<8x32xf32>
    %182 = arith.mulf %177, %179 : vector<8x32xf32>
    %183 = arith.addf %181, %182 : vector<8x32xf32>
    %184 = math.tanh %183 : vector<8x32xf32>
    %185 = arith.mulf %180, %184 : vector<8x32xf32>
    %c8_i32 = arith.constant 8 : i32
    %c0_57 = arith.constant 0 : index
    %c0_58 = arith.constant 0 : index
    %186 = vector.load %arg9[%c0_57, %c0_58] : memref<32x32xf32, #tpu.memory_space<vmem>>, vector<32x32xf32>
    %cst_59 = arith.constant dense<0.000000e+00> : vector<8x32xf32>
    %187 = tpu.matmul %185, %186, %cst_59 {dimension_numbers = #tpu.dot_dimension_numbers<[1], [0], [0], [1], [0, 0, 1, 1], [], []>} : vector<8x32xf32>, vector<32x32xf32>, vector<8x32xf32> -> vector<8x32xf32>
    %c0_60 = arith.constant 0 : index
    %c0_61 = arith.constant 0 : index
    %188 = vector.load %arg10[%c0_60, %c0_61] : memref<1x32xf32, #tpu.memory_space<vmem>>, vector<1x32xf32>
    %189 = vector.broadcast %188 : vector<1x32xf32> to vector<8x32xf32>
    %190 = arith.addf %187, %189 : vector<8x32xf32>
    %cst_62 = arith.constant 0.000000e+00 : f32
    %191 = vector.broadcast %cst_62 : f32 to vector<8x32xf32>
    %192 = arith.maximumf %190, %191 : vector<8x32xf32>
    %c0_63 = arith.constant 0 : index
    %c0_64 = arith.constant 0 : index
    %193 = vector.load %arg11[%c0_63, %c0_64] : memref<32x128xf32, #tpu.memory_space<vmem>>, vector<32x128xf32>
    %cst_65 = arith.constant dense<0.000000e+00> : vector<8x128xf32>
    %194 = tpu.matmul %192, %193, %cst_65 {dimension_numbers = #tpu.dot_dimension_numbers<[1], [0], [0], [1], [0, 0, 1, 1], [], []>} : vector<8x32xf32>, vector<32x128xf32>, vector<8x128xf32> -> vector<8x128xf32>
    %c0_66 = arith.constant 0 : index
    %c0_67 = arith.constant 0 : index
    %195 = vector.load %arg12[%c0_66, %c0_67] : memref<1x128xf32, #tpu.memory_space<vmem>>, vector<1x128xf32>
    %196 = vector.broadcast %195 : vector<1x128xf32> to vector<8x128xf32>
    %197 = arith.addf %194, %196 : vector<8x128xf32>
    %198 = arith.negf %197 : vector<8x128xf32>
    %199 = math.exp %198 : vector<8x128xf32>
    %cst_68 = arith.constant 1.000000e+00 : f32
    %200 = vector.broadcast %cst_68 : f32 to vector<8x128xf32>
    %201 = arith.addf %200, %199 : vector<8x128xf32>
    %202 = arith.divf %200, %201 : vector<8x128xf32>
    %c0_69 = arith.constant 0 : index
    %c0_70 = arith.constant 0 : index
    %203 = vector.load %arg13[%c0_69, %c0_70] : memref<8x128xf32, #tpu.memory_space<vmem>>, vector<8x128xf32>
    tpu.vector_store %arg13[%c0_69, %c0_70], %202 {strides = array<i32>} : memref<8x128xf32, #tpu.memory_space<vmem>>, vector<8x128xf32>,
    return
  }
  func.func @transform_0(%arg0: i32) -> (i32, i32, i32) {
    %c0_i32 = arith.constant 0 : i32
    %c0_i32_0 = arith.constant 0 : i32
    %c0_i32_1 = arith.constant 0 : i32
    return %c0_i32, %arg0, %c0_i32_0 : i32, i32, i32
  }
  func.func @transform_1(%arg0: i32) -> (i32, i32) {
    %c0_i32 = arith.constant 0 : i32
    %c0_i32_0 = arith.constant 0 : i32
    %c0_i32_1 = arith.constant 0 : i32
    return %c0_i32, %c0_i32_0 : i32, i32
  }
  func.func @transform_2(%arg0: i32) -> (i32, i32) {
    %c0_i32 = arith.constant 0 : i32
    %c0_i32_0 = arith.constant 0 : i32
    %c0_i32_1 = arith.constant 0 : i32
    return %c0_i32, %c0_i32_0 : i32, i32
  }
  func.func @transform_3(%arg0: i32) -> (i32, i32) {
    %c0_i32 = arith.constant 0 : i32
    %c0_i32_0 = arith.constant 0 : i32
    %c0_i32_1 = arith.constant 0 : i32
    return %c0_i32, %c0_i32_0 : i32, i32
  }
  func.func @transform_4(%arg0: i32) -> (i32, i32) {
    %c0_i32 = arith.constant 0 : i32
    %c0_i32_0 = arith.constant 0 : i32
    %c0_i32_1 = arith.constant 0 : i32
    return %c0_i32, %c0_i32_0 : i32, i32
  }
  func.func @transform_5(%arg0: i32) -> (i32, i32) {
    %c0_i32 = arith.constant 0 : i32
    %c0_i32_0 = arith.constant 0 : i32
    %c0_i32_1 = arith.constant 0 : i32
    return %c0_i32, %c0_i32_0 : i32, i32
  }
  func.func @transform_6(%arg0: i32) -> (i32, i32) {
    %c0_i32 = arith.constant 0 : i32
    %c0_i32_0 = arith.constant 0 : i32
    %c0_i32_1 = arith.constant 0 : i32
    return %c0_i32, %c0_i32_0 : i32, i32
  }
  func.func @transform_7(%arg0: i32) -> (i32, i32) {
    %c0_i32 = arith.constant 0 : i32
    %c0_i32_0 = arith.constant 0 : i32
    %c0_i32_1 = arith.constant 0 : i32
    return %c0_i32, %c0_i32_0 : i32, i32
  }
  func.func @transform_8(%arg0: i32) -> (i32, i32) {
    %c0_i32 = arith.constant 0 : i32
    %c0_i32_0 = arith.constant 0 : i32
    %c0_i32_1 = arith.constant 0 : i32
    return %c0_i32, %c0_i32_0 : i32, i32
  }
  func.func @transform_9(%arg0: i32) -> (i32, i32) {
    %c0_i32 = arith.constant 0 : i32
    %c0_i32_0 = arith.constant 0 : i32
    %c0_i32_1 = arith.constant 0 : i32
    return %c0_i32, %c0_i32_0 : i32, i32
  }
  func.func @transform_10(%arg0: i32) -> (i32, i32) {
    %c0_i32 = arith.constant 0 : i32
    %c0_i32_0 = arith.constant 0 : i32
    %c0_i32_1 = arith.constant 0 : i32
    return %c0_i32, %c0_i32_0 : i32, i32
  }
  func.func @transform_11(%arg0: i32) -> (i32, i32) {
    %c0_i32 = arith.constant 0 : i32
    %c0_i32_0 = arith.constant 0 : i32
    %c0_i32_1 = arith.constant 0 : i32
    return %c0_i32, %c0_i32_0 : i32, i32
  }
  func.func @transform_12(%arg0: i32) -> (i32, i32) {
    %c0_i32 = arith.constant 0 : i32
    %c0_i32_0 = arith.constant 0 : i32
    return %arg0, %c0_i32 : i32, i32
  }
}

</mosaic_0001>

<llo_original>
// kernel: tpu_custom_call.1
$region0: #{tpu_custom_call.1}
  #allocation0 [shape = 'u32[]', space=smem, size = 0x4, offset = 0x4, fixed_abs, tag = 'smem constant byte address 0x4 - core index']
  #allocation1 [shape = 'u32[144,128]{1,0:T(1,128)}', space=vmem, size = 0x12000, scoped, tag = 'internal scratch']
  #allocation2 [shape = 'f32[8,8,128]{2,1,0:T(8,128)}', space=vmem, size = 0x8000, scoped, tag = 'scratch operand']
  %s0 = inlined_call_operand.hbm [shape: f32[8,8,15], index: 0, kind: input, shape index: {}]
  %s1 = inlined_call_operand.hbm [shape: f32[15,32], index: 1, kind: input, shape index: {}]
  %s2 = inlined_call_operand.vmem [shape: f32[1,32], index: 2, kind: input, shape index: {}]
  %s3 = inlined_call_operand.hbm [shape: f32[32,32], index: 3, kind: input, shape index: {}]
  %s4 = inlined_call_operand.vmem [shape: f32[1,32], index: 4, kind: input, shape index: {}]
  %s5 = inlined_call_operand.hbm [shape: f32[32,128], index: 5, kind: input, shape index: {}]
  %s6 = inlined_call_operand.hbm [shape: f32[32,128], index: 6, kind: input, shape index: {}]
  %s7 = inlined_call_operand.vmem [shape: f32[1,128], index: 7, kind: input, shape index: {}]
  %s8 = inlined_call_operand.hbm [shape: f32[32,32], index: 8, kind: input, shape index: {}]
  %s9 = inlined_call_operand.vmem [shape: f32[1,32], index: 9, kind: input, shape index: {}]
  %s10 = inlined_call_operand.hbm [shape: f32[32,128], index: 10, kind: input, shape index: {}]
  %s11 = inlined_call_operand.vmem [shape: f32[1,128], index: 11, kind: input, shape index: {}]
  %s12 = inlined_call_operand.hbm [shape: f32[8,128], index: 12, kind: output, shape index: {}]
  %s13 = sld [smem:[#allocation0]]
  $region86: #{tpu_custom_call.1} parent=0
    _
  %s15 = ssub.s32 1, %s13
  %s16 = scalar_select 0, %s15, %s13
  $region1: #{tpu_custom_call.1} parent=0
    #allocation3 [shape = 'u8[32768]{0}', space=vmem, size = 0x8000, scoped, tag = 'input window, operand 0, single buffered']
    #allocation4 [shape = 's32[1]{0}', space=sflag, size = 0x4, scoped, tag = 'scoped memory for tpu_custom_call.1']
    #allocation5 [shape = 's32[1]{0}', space=sflag, size = 0x4, scoped, tag = 'scoped memory for tpu_custom_call.1']
    #allocation6 [shape = 'u8[8192]{0}', space=vmem, size = 0x2000, scoped, tag = 'input window, operand 1, single buffered']
    #allocation7 [shape = 's32[1]{0}', space=sflag, size = 0x4, scoped, tag = 'scoped memory for tpu_custom_call.1']
    #allocation8 [shape = 'u8[16384]{0}', space=vmem, size = 0x4000, scoped, tag = 'input window, operand 3, single buffered']
    #allocation9 [shape = 'u8[16384]{0}', space=vmem, size = 0x4000, scoped, tag = 'input window, operand 5, single buffered']
    #allocation10 [shape = 's32[1]{0}', space=sflag, size = 0x4, scoped, tag = 'scoped memory for tpu_custom_call.1']
    #allocation11 [shape = 'u8[16384]{0}', space=vmem, size = 0x4000, scoped, tag = 'input window, operand 6, single buffered']
    #allocation12 [shape = 'u8[16384]{0}', space=vmem, size = 0x4000, scoped, tag = 'input window, operand 8, single buffered']
    #allocation13 [shape = 's32[1]{0}', space=sflag, size = 0x4, scoped, tag = 'scoped memory for tpu_custom_call.1']
    #allocation14 [shape = 'u8[16384]{0}', space=vmem, size = 0x4000, scoped, tag = 'input window, operand 10, single buffered']
    #allocation15 [shape = 'u8[4096]{0}', space=vmem, size = 0x1000, scoped, tag = 'output window, operand 0, single buffered']
    %17 = vsyncpa [#allocation4], 0
    %18 = vsyncpa [#allocation7], 0
    %19 = vsyncpa [#allocation10], 0
    %20 = vsyncpa [#allocation13], 0
    %21 = vsyncpa [#allocation5], 0
    // Predicated region
    $region2: #{tpu_custom_call.1} parent=1 // pred_check
      _
    $region3: #{tpu_custom_call.1} parent=1 // pred_check_branch
      %23 = sbr.rel (0) target = $region5
    $region4: #{tpu_custom_call.1} parent=1 // pred_region
      %s25 = ssub.s32 1024, 1024
      %26 = vsyncadd [#allocation4], %s25
      %s27 = sshll.u32 [#allocation3], 4
      %s28 = int_to_ptr.vmem [resolvable:$true] %s27
      %33 = dma.hbm_to_vmem [thread:$0]  %s0, 1024, %s28, [#allocation4], 128, 128, 8
    $region5: #{tpu_custom_call.1} parent=1 // pred_fallthru
      _
    // Predicated region
    $region6: #{tpu_custom_call.1} parent=1 // pred_check
      _
    $region7: #{tpu_custom_call.1} parent=1 // pred_check_branch
      %35 = sbr.rel (0) target = $region9
    $region8: #{tpu_custom_call.1} parent=1 // pred_region
      %s37 = ssub.s32 256, 256
      %38 = vsyncadd [#allocation7], %s37
      %s39 = sshll.u32 [#allocation6], 4
      %s40 = int_to_ptr.vmem [resolvable:$true] %s39
      %45 = dma.hbm_to_vmem [thread:$0]  %s1, 256, %s40, [#allocation7], 128, 128, 8
    $region9: #{tpu_custom_call.1} parent=1 // pred_fallthru
      _
    // Predicated region
    $region10: #{tpu_custom_call.1} parent=1 // pred_check
      _
    $region11: #{tpu_custom_call.1} parent=1 // pred_check_branch
      %47 = sbr.rel (0) target = $region13
    $region12: #{tpu_custom_call.1} parent=1 // pred_region
      _
    $region13: #{tpu_custom_call.1} parent=1 // pred_fallthru
      _
    // Predicated region
    $region14: #{tpu_custom_call.1} parent=1 // pred_check
      _
    $region15: #{tpu_custom_call.1} parent=1 // pred_check_branch
      %49 = sbr.rel (0) target = $region17
    $region16: #{tpu_custom_call.1} parent=1 // pred_region
      %s51 = ssub.s32 512, 512
      %52 = vsyncadd [#allocation7], %s51
      %s53 = sshll.u32 [#allocation8], 4
      %s54 = int_to_ptr.vmem [resolvable:$true] %s53
      %59 = dma.hbm_to_vmem [thread:$0]  %s3, 512, %s54, [#allocation7], 128, 128, 8
    $region17: #{tpu_custom_call.1} parent=1 // pred_fallthru
      _
    // Predicated region
    $region18: #{tpu_custom_call.1} parent=1 // pred_check
      _
    $region19: #{tpu_custom_call.1} parent=1 // pred_check_branch
      %61 = sbr.rel (0) target = $region21
    $region20: #{tpu_custom_call.1} parent=1 // pred_region
      _
    $region21: #{tpu_custom_call.1} parent=1 // pred_fallthru
      _
    // Predicated region
    $region22: #{tpu_custom_call.1} parent=1 // pred_check
      _
    $region23: #{tpu_custom_call.1} parent=1 // pred_check_branch
      %63 = sbr.rel (0) target = $region25
    $region24: #{tpu_custom_call.1} parent=1 // pred_region
      %s65 = ssub.s32 512, 512
      %66 = vsyncadd [#allocation10], %s65
      %s67 = sshll.u32 [#allocation9], 4
      %s68 = int_to_ptr.vmem [resolvable:$true] %s67
      %73 = dma.hbm_to_vmem [thread:$0]  %s5, 512, %s68, [#allocation10], 128, 128, 8
    $region25: #{tpu_custom_call.1} parent=1 // pred_fallthru
      _
    // Predicated region
    $region26: #{tpu_custom_call.1} parent=1 // pred_check
      _
    $region27: #{tpu_custom_call.1} parent=1 // pred_check_branch
      %75 = sbr.rel (0) target = $region29
    $region28: #{tpu_custom_call.1} parent=1 // pred_region
      %s77 = ssub.s32 512, 512
      %78 = vsyncadd [#allocation10], %s77
      %s79 = sshll.u32 [#allocation11], 4
      %s80 = int_to_ptr.vmem [resolvable:$true] %s79
      %85 = dma.hbm_to_vmem [thread:$0]  %s6, 512, %s80, [#allocation10], 128, 128, 8
    $region29: #{tpu_custom_call.1} parent=1 // pred_fallthru
      _
    // Predicated region
    $region30: #{tpu_custom_call.1} parent=1 // pred_check
      _
    $region31: #{tpu_custom_call.1} parent=1 // pred_check_branch
      %87 = sbr.rel (0) target = $region33
    $region32: #{tpu_custom_call.1} parent=1 // pred_region
      _
    $region33: #{tpu_custom_call.1} parent=1 // pred_fallthru
      _
    // Predicated region
    $region34: #{tpu_custom_call.1} parent=1 // pred_check
      _
    $region35: #{tpu_custom_call.1} parent=1 // pred_check_branch
      %89 = sbr.rel (0) target = $region37
    $region36: #{tpu_custom_call.1} parent=1 // pred_region
      %s91 = ssub.s32 512, 512
      %92 = vsyncadd [#allocation13], %s91
      %s93 = sshll.u32 [#allocation12], 4
      %s94 = int_to_ptr.vmem [resolvable:$true] %s93
      %99 = dma.hbm_to_vmem [thread:$0]  %s8, 512, %s94, [#allocation13], 128, 128, 8
    $region37: #{tpu_custom_call.1} parent=1 // pred_fallthru
      _
    // Predicated region
    $region38: #{tpu_custom_call.1} parent=1 // pred_check
      _
    $region39: #{tpu_custom_call.1} parent=1 // pred_check_branch
      %101 = sbr.rel (0) target = $region41
    $region40: #{tpu_custom_call.1} parent=1 // pred_region
      _
    $region41: #{tpu_custom_call.1} parent=1 // pred_fallthru
      _
    // Predicated region
    $region42: #{tpu_custom_call.1} parent=1 // pred_check
      _
    $region43: #{tpu_custom_call.1} parent=1 // pred_check_branch
      %103 = sbr.rel (0) target = $region45
    $region44: #{tpu_custom_call.1} parent=1 // pred_region
      %s105 = ssub.s32 512, 512
      %106 = vsyncadd [#allocation13], %s105
      %s107 = sshll.u32 [#allocation14], 4
      %s108 = int_to_ptr.vmem [resolvable:$true] %s107
      %113 = dma.hbm_to_vmem [thread:$0]  %s10, 512, %s108, [#allocation13], 128, 128, 8
    $region45: #{tpu_custom_call.1} parent=1 // pred_fallthru
      _
    // Predicated region
    $region46: #{tpu_custom_call.1} parent=1 // pred_check
      _
    $region47: #{tpu_custom_call.1} parent=1 // pred_check_branch
      %115 = sbr.rel (0) target = $region49
    $region48: #{tpu_custom_call.1} parent=1 // pred_region
      _
    $region49: #{tpu_custom_call.1} parent=1 // pred_fallthru
      _
    // Predicated region
    $region50: #{tpu_custom_call.1} parent=1 // pred_check
      _
    $region51: #{tpu_custom_call.1} parent=1 // pred_check_branch
      %117 = sbr.rel (0) target = $region53
    $region52: #{tpu_custom_call.1} parent=1 // pred_region
      %118 = dma.done [#allocation4], 1024
    $region53: #{tpu_custom_call.1} parent=1 // pred_fallthru
      _
    // Predicated region
    $region54: #{tpu_custom_call.1} parent=1 // pred_check
      _
    $region55: #{tpu_custom_call.1} parent=1 // pred_check_branch
      %120 = sbr.rel (0) target = $region57
    $region56: #{tpu_custom_call.1} parent=1 // pred_region
      %121 = dma.done [#allocation7], 256
    $region57: #{tpu_custom_call.1} parent=1 // pred_fallthru
      _
    // Predicated region
    $region58: #{tpu_custom_call.1} parent=1 // pred_check
      _
    $region59: #{tpu_custom_call.1} parent=1 // pred_check_branch
      %123 = sbr.rel (0) target = $region61
    $region60: #{tpu_custom_call.1} parent=1 // pred_region
      %124 = dma.done [#allocation7], 512
    $region61: #{tpu_custom_call.1} parent=1 // pred_fallthru
      _
    // Predicated region
    $region62: #{tpu_custom_call.1} parent=1 // pred_check
      _
    $region63: #{tpu_custom_call.1} parent=1 // pred_check_branch
      %126 = sbr.rel (0) target = $region65
    $region64: #{tpu_custom_call.1} parent=1 // pred_region
      %127 = dma.done [#allocation10], 512
    $region65: #{tpu_custom_call.1} parent=1 // pred_fallthru
      _
    // Predicated region
    $region66: #{tpu_custom_call.1} parent=1 // pred_check
      _
    $region67: #{tpu_custom_call.1} parent=1 // pred_check_branch
      %129 = sbr.rel (0) target = $region69
    $region68: #{tpu_custom_call.1} parent=1 // pred_region
      %130 = dma.done [#allocation10], 512
    $region69: #{tpu_custom_call.1} parent=1 // pred_fallthru
      _
    // Predicated region
    $region70: #{tpu_custom_call.1} parent=1 // pred_check
      _
    $region71: #{tpu_custom_call.1} parent=1 // pred_check_branch
      %132 = sbr.rel (0) target = $region73
    $region72: #{tpu_custom_call.1} parent=1 // pred_region
      %133 = dma.done [#allocation13], 512
    $region73: #{tpu_custom_call.1} parent=1 // pred_fallthru
      _
    // Predicated region
    $region74: #{tpu_custom_call.1} parent=1 // pred_check
      _
    $region75: #{tpu_custom_call.1} parent=1 // pred_check_branch
      %135 = sbr.rel (0) target = $region77
    $region76: #{tpu_custom_call.1} parent=1 // pred_region
      %136 = dma.done [#allocation13], 512
    $region77: #{tpu_custom_call.1} parent=1 // pred_fallthru
      _
    %v137 = vld [vmem:[#allocation3] sm:$0xff]
    %v138 = vld [vmem:[#allocation3 + $0x8] sm:$0xff]
    %v139 = vld [vmem:[#allocation3 + $0x10] sm:$0xff]
    %v140 = vld [vmem:[#allocation3 + $0x18] sm:$0xff]
    %v141 = vld [vmem:[#allocation3 + $0x20] sm:$0xff]
    %v142 = vld [vmem:[#allocation3 + $0x28] sm:$0xff]
    %v143 = vld [vmem:[#allocation3 + $0x30] sm:$0xff]
    %v144 = vld [vmem:[#allocation3 + $0x38] sm:$0xff]
    %v145 = vld [vmem:[#allocation6] sm:$0xff]
    %v146 = vld [vmem:[#allocation6 + $0x8] sm:$0x7f]
    %v147 = vld [vmem:[%s2] sm:$0x1]
    %v149 = vlaneseq
    %v150 = vshrl.u32 %v149, 7
    %v151 = vsub.s32 0, %v150
    %v152 = vrot.slane %v147, %v151
    %vm154 = vcmask 121856
    %v156 = vsel %vm154, %v137, 0
    %v159 = vsel %vm154, %v138, 0
    %v162 = vsel %vm154, %v139, 0
    %v165 = vsel %vm154, %v140, 0
    %v168 = vsel %vm154, %v141, 0
    %v171 = vsel %vm154, %v142, 0
    %v174 = vsel %vm154, %v143, 0
    %v177 = vsel %vm154, %v144, 0
    %vm179 = vcmask 1046528
    %v181 = vsel %vm179, %v146, 0
    %183 = vmatprep.subr.mxu0 0.0
    %184 = vmatpush1.msra.mxu0 0.0
    %185 = vmatprep.subr.mxu0 0.0
    %186 = vmatpush1.msra.mxu0 0.0
    %187 = vmatprep.subr.mxu0 0.0
    %188 = vmatpush1.msra.mxu0 0.0
    %189 = vmatprep.subr.mxu0 0.0
    %190 = vmatpush1.msra.mxu0 0.0
    %191 = vmatprep.subr.mxu0 0.0
    %192 = vmatpush1.msra.mxu0 0.0
    %193 = vmatprep.subr.mxu0 0.0
    %194 = vmatpush1.msra.mxu0 0.0
    %195 = vmatprep.subr.mxu0 0.0
    %196 = vmatpush1.msra.mxu0 0.0
    %197 = vmatprep.subr.mxu0 0.0
    %198 = vmatpush1.msra.mxu0 0.0
    %199 = vmatprep.subr.mxu0 0.0
    %200 = vmatpush1.msra.mxu0 0.0
    %201 = vmatprep.subr.mxu0 0.0
    %202 = vmatpush1.msra.mxu0 0.0
    %203 = vmatprep.subr.mxu0 0.0
    %204 = vmatpush1.msra.mxu0 0.0
    %205 = vmatprep.subr.mxu0 0.0
    %206 = vmatpush1.msra.mxu0 0.0
    %207 = vmatprep.subr.mxu0 0.0
    %208 = vmatpush1.msra.mxu0 0.0
    %209 = vmatprep.subr.mxu0 0.0
    %210 = vmatpush1.msra.mxu0 0.0
    %211 = vmatprep.subr.mxu0 0.0
    %212 = vmatpush1.msra.mxu0 %v181
    %213 = vmatprep.subr.mxu0 0.0
    %214 = vmatpush1.msra.mxu0 %v145
    %215 = vmatprep.subr.mxu0 0.0
    %216 = vmatpush2.msra.mxu0 0.0
    %217 = vmatprep.subr.mxu0 0.0
    %218 = vmatpush2.msra.mxu0 0.0
    %219 = vmatprep.subr.mxu0 0.0
    %220 = vmatpush2.msra.mxu0 0.0
    %221 = vmatprep.subr.mxu0 0.0
    %222 = vmatpush2.msra.mxu0 0.0
    %223 = vmatprep.subr.mxu0 0.0
    %224 = vmatpush2.msra.mxu0 0.0
    %225 = vmatprep.subr.mxu0 0.0
    %226 = vmatpush2.msra.mxu0 0.0
    %227 = vmatprep.subr.mxu0 0.0
    %228 = vmatpush2.msra.mxu0 0.0
    %229 = vmatprep.subr.mxu0 0.0
    %230 = vmatpush2.msra.mxu0 0.0
    %231 = vmatprep.subr.mxu0 0.0
    %232 = vmatpush2.msra.mxu0 0.0
    %233 = vmatprep.subr.mxu0 0.0
    %234 = vmatpush2.msra.mxu0 0.0
    %235 = vmatprep.subr.mxu0 0.0
    %236 = vmatpush2.msra.mxu0 0.0
    %237 = vmatprep.subr.mxu0 0.0
    %238 = vmatpush2.msra.mxu0 0.0
    %239 = vmatprep.subr.mxu0 0.0
    %240 = vmatpush2.msra.mxu0 0.0
    %241 = vmatprep.subr.mxu0 0.0
    %242 = vmatpush2.msra.mxu0 0.0
    %243 = vmatprep.subr.mxu0 0.0
    %244 = vmatpush2.msra.mxu0 0.0
    %245 = vmatprep.subr.mxu0 0.0
    %246 = vmatpush2.msra.mxu0 0.0
    %247 = vmatprep.mubr.f32.mxu0 0.0
    %248 = vmatmul.mubr.f32.gmra.mxu0 %v156
    %v249 = vpop.f32.mrf.mxu0
    %v250 = vadd.f32 %v152, %v249
    %v251 = vpop.f32.mrf.mxu0
    %252 = vmatprep.mubr.f32.mxu0 0.0
    %253 = vmatmul.mubr.f32.gmra.mxu0 %v159
    %v254 = vpop.f32.mrf.mxu0
    %v255 = vadd.f32 %v152, %v254
    %v256 = vpop.f32.mrf.mxu0
    %257 = vmatprep.mubr.f32.mxu0 0.0
    %258 = vmatmul.mubr.f32.gmra.mxu0 %v162
    %v259 = vpop.f32.mrf.mxu0
    %v260 = vadd.f32 %v152, %v259
    %v261 = vpop.f32.mrf.mxu0
    %262 = vmatprep.mubr.f32.mxu0 0.0
    %263 = vmatmul.mubr.f32.gmra.mxu0 %v165
    %v264 = vpop.f32.mrf.mxu0
    %v265 = vadd.f32 %v152, %v264
    %v266 = vpop.f32.mrf.mxu0
    %267 = vmatprep.mubr.f32.mxu0 0.0
    %268 = vmatmul.mubr.f32.gmra.mxu0 %v168
    %v269 = vpop.f32.mrf.mxu0
    %v270 = vadd.f32 %v152, %v269
    %v271 = vpop.f32.mrf.mxu0
    %272 = vmatprep.mubr.f32.mxu0 0.0
    %273 = vmatmul.mubr.f32.gmra.mxu0 %v171
    %v274 = vpop.f32.mrf.mxu0
    %v275 = vadd.f32 %v152, %v274
    %v276 = vpop.f32.mrf.mxu0
    %277 = vmatprep.mubr.f32.mxu0 0.0
    %278 = vmatmul.mubr.f32.gmra.mxu0 %v174
    %v279 = vpop.f32.mrf.mxu0
    %v280 = vadd.f32 %v152, %v279
    %v281 = vpop.f32.mrf.mxu0
    %282 = vmatprep.mubr.f32.mxu0 0.0
    %283 = vmatmul.mubr.f32.gmra.mxu0 %v177
    %v284 = vpop.f32.mrf.mxu0
    %v285 = vadd.f32 %v152, %v284
    %v286 = vpop.f32.mrf.mxu0
    %287 = vdwg.mxu0
    %v288 = vmax.f32 %v250, 0.0
    %v289 = vmax.f32 %v255, 0.0
    %v290 = vmax.f32 %v260, 0.0
    %v291 = vmax.f32 %v265, 0.0
    %v292 = vmax.f32 %v270, 0.0
    %v293 = vmax.f32 %v275, 0.0
    %v294 = vmax.f32 %v280, 0.0
    %v295 = vmax.f32 %v285, 0.0
    %v296 = vld [vmem:[#allocation8] sm:$0xff]
    %v297 = vld [vmem:[#allocation8 + $0x8] sm:$0xff]
    %v298 = vld [vmem:[#allocation8 + $0x10] sm:$0xff]
    %v299 = vld [vmem:[#allocation8 + $0x18] sm:$0xff]
    %v300 = vld [vmem:[%s4] sm:$0x1]
    %v302 = vlaneseq
    %v303 = vshrl.u32 %v302, 7
    %v304 = vsub.s32 0, %v303
    %v305 = vrot.slane %v300, %v304
    %vm307 = vcmask 261120
    %v309 = vsel %vm307, %v288, 0
    %v312 = vsel %vm307, %v289, 0
    %v315 = vsel %vm307, %v290, 0
    %v318 = vsel %vm307, %v291, 0
    %v321 = vsel %vm307, %v292, 0
    %v324 = vsel %vm307, %v293, 0
    %v327 = vsel %vm307, %v294, 0
    %v330 = vsel %vm307, %v295, 0
    %332 = vmatprep.subr.mxu0 0.0
    %333 = vmatpush1.msra.mxu0 0.0
    %334 = vmatprep.subr.mxu0 0.0
    %335 = vmatpush1.msra.mxu0 0.0
    %336 = vmatprep.subr.mxu0 0.0
    %337 = vmatpush1.msra.mxu0 0.0
    %338 = vmatprep.subr.mxu0 0.0
    %339 = vmatpush1.msra.mxu0 0.0
    %340 = vmatprep.subr.mxu0 0.0
    %341 = vmatpush1.msra.mxu0 0.0
    %342 = vmatprep.subr.mxu0 0.0
    %343 = vmatpush1.msra.mxu0 0.0
    %344 = vmatprep.subr.mxu0 0.0
    %345 = vmatpush1.msra.mxu0 0.0
    %346 = vmatprep.subr.mxu0 0.0
    %347 = vmatpush1.msra.mxu0 0.0
    %348 = vmatprep.subr.mxu0 0.0
    %349 = vmatpush1.msra.mxu0 0.0
    %350 = vmatprep.subr.mxu0 0.0
    %351 = vmatpush1.msra.mxu0 0.0
    %352 = vmatprep.subr.mxu0 0.0
    %353 = vmatpush1.msra.mxu0 0.0
    %354 = vmatprep.subr.mxu0 0.0
    %355 = vmatpush1.msra.mxu0 0.0
    %356 = vmatprep.subr.mxu0 0.0
    %357 = vmatpush1.msra.mxu0 %v299
    %358 = vmatprep.subr.mxu0 0.0
    %359 = vmatpush1.msra.mxu0 %v298
    %360 = vmatprep.subr.mxu0 0.0
    %361 = vmatpush1.msra.mxu0 %v297
    %362 = vmatprep.subr.mxu0 0.0
    %363 = vmatpush1.msra.mxu0 %v296
    %364 = vmatprep.subr.mxu0 0.0
    %365 = vmatpush2.msra.mxu0 0.0
    %366 = vmatprep.subr.mxu0 0.0
    %367 = vmatpush2.msra.mxu0 0.0
    %368 = vmatprep.subr.mxu0 0.0
    %369 = vmatpush2.msra.mxu0 0.0
    %370 = vmatprep.subr.mxu0 0.0
    %371 = vmatpush2.msra.mxu0 0.0
    %372 = vmatprep.subr.mxu0 0.0
    %373 = vmatpush2.msra.mxu0 0.0
    %374 = vmatprep.subr.mxu0 0.0
    %375 = vmatpush2.msra.mxu0 0.0
    %376 = vmatprep.subr.mxu0 0.0
    %377 = vmatpush2.msra.mxu0 0.0
    %378 = vmatprep.subr.mxu0 0.0
    %379 = vmatpush2.msra.mxu0 0.0
    %380 = vmatprep.subr.mxu0 0.0
    %381 = vmatpush2.msra.mxu0 0.0
    %382 = vmatprep.subr.mxu0 0.0
    %383 = vmatpush2.msra.mxu0 0.0
    %384 = vmatprep.subr.mxu0 0.0
    %385 = vmatpush2.msra.mxu0 0.0
    %386 = vmatprep.subr.mxu0 0.0
    %387 = vmatpush2.msra.mxu0 0.0
    %388 = vmatprep.subr.mxu0 0.0
    %389 = vmatpush2.msra.mxu0 0.0
    %390 = vmatprep.subr.mxu0 0.0
    %391 = vmatpush2.msra.mxu0 0.0
    %392 = vmatprep.subr.mxu0 0.0
    %393 = vmatpush2.msra.mxu0 0.0
    %394 = vmatprep.subr.mxu0 0.0
    %395 = vmatpush2.msra.mxu0 0.0
    %396 = vmatprep.mubr.f32.mxu0 0.0
    %397 = vmatmul.mubr.f32.gmra.mxu0 %v309
    %v398 = vpop.f32.mrf.mxu0
    %v399 = vadd.f32 %v305, %v398
    %v400 = vpop.f32.mrf.mxu0
    %401 = vmatprep.mubr.f32.mxu0 0.0
    %402 = vmatmul.mubr.f32.gmra.mxu0 %v312
    %v403 = vpop.f32.mrf.mxu0
    %v404 = vadd.f32 %v305, %v403
    %v405 = vpop.f32.mrf.mxu0
    %406 = vmatprep.mubr.f32.mxu0 0.0
    %407 = vmatmul.mubr.f32.gmra.mxu0 %v315
    %v408 = vpop.f32.mrf.mxu0
    %v409 = vadd.f32 %v305, %v408
    %v410 = vpop.f32.mrf.mxu0
    %411 = vmatprep.mubr.f32.mxu0 0.0
    %412 = vmatmul.mubr.f32.gmra.mxu0 %v318
    %v413 = vpop.f32.mrf.mxu0
    %v414 = vadd.f32 %v305, %v413
    %v415 = vpop.f32.mrf.mxu0
    %416 = vmatprep.mubr.f32.mxu0 0.0
    %417 = vmatmul.mubr.f32.gmra.mxu0 %v321
    %v418 = vpop.f32.mrf.mxu0
    %v419 = vadd.f32 %v305, %v418
    %v420 = vpop.f32.mrf.mxu0
    %421 = vmatprep.mubr.f32.mxu0 0.0
    %422 = vmatmul.mubr.f32.gmra.mxu0 %v324
    %v423 = vpop.f32.mrf.mxu0
    %v424 = vadd.f32 %v305, %v423
    %v425 = vpop.f32.mrf.mxu0
    %426 = vmatprep.mubr.f32.mxu0 0.0
    %427 = vmatmul.mubr.f32.gmra.mxu0 %v327
    %v428 = vpop.f32.mrf.mxu0
    %v429 = vadd.f32 %v305, %v428
    %v430 = vpop.f32.mrf.mxu0
    %431 = vmatprep.mubr.f32.mxu0 0.0
    %432 = vmatmul.mubr.f32.gmra.mxu0 %v330
    %v433 = vpop.f32.mrf.mxu0
    %v434 = vadd.f32 %v305, %v433
    %v435 = vpop.f32.mrf.mxu0
    %436 = vdwg.mxu0
    %v437 = vmax.f32 %v399, 0.0
    %v438 = vmax.f32 %v404, 0.0
    %v439 = vmax.f32 %v409, 0.0
    %v440 = vmax.f32 %v414, 0.0
    %v441 = vmax.f32 %v419, 0.0
    %v442 = vmax.f32 %v424, 0.0
    %v443 = vmax.f32 %v429, 0.0
    %v444 = vmax.f32 %v434, 0.0
    %v445 = vld [vmem:[#allocation9] sm:$0xff]
    %v446 = vld [vmem:[#allocation9 + $0x8] sm:$0xff]
    %v447 = vld [vmem:[#allocation9 + $0x10] sm:$0xff]
    %v448 = vld [vmem:[#allocation9 + $0x18] sm:$0xff]
    %v449 = vld [vmem:[%s7] sm:$0x1]
    %v451 = vlaneseq
    %v452 = vshrl.u32 %v451, 7
    %v453 = vsub.s32 0, %v452
    %v454 = vrot.slane %v449, %v453
    %v457 = vsel %vm307, %v437, 0
    %v460 = vsel %vm307, %v438, 0
    %v463 = vsel %vm307, %v439, 0
    %v466 = vsel %vm307, %v440, 0
    %v469 = vsel %vm307, %v441, 0
    %v472 = vsel %vm307, %v442, 0
    %v475 = vsel %vm307, %v443, 0
    %v478 = vsel %vm307, %v444, 0
    %480 = vmatprep.subr.mxu0 0.0
    %481 = vmatpush1.msra.mxu0 0.0
    %482 = vmatprep.subr.mxu0 0.0
    %483 = vmatpush1.msra.mxu0 0.0
    %484 = vmatprep.subr.mxu0 0.0
    %485 = vmatpush1.msra.mxu0 0.0
    %486 = vmatprep.subr.mxu0 0.0
    %487 = vmatpush1.msra.mxu0 0.0
    %488 = vmatprep.subr.mxu0 0.0
    %489 = vmatpush1.msra.mxu0 0.0
    %490 = vmatprep.subr.mxu0 0.0
    %491 = vmatpush1.msra.mxu0 0.0
    %492 = vmatprep.subr.mxu0 0.0
    %493 = vmatpush1.msra.mxu0 0.0
    %494 = vmatprep.subr.mxu0 0.0
    %495 = vmatpush1.msra.mxu0 0.0
    %496 = vmatprep.subr.mxu0 0.0
    %497 = vmatpush1.msra.mxu0 0.0
    %498 = vmatprep.subr.mxu0 0.0
    %499 = vmatpush1.msra.mxu0 0.0
    %500 = vmatprep.subr.mxu0 0.0
    %501 = vmatpush1.msra.mxu0 0.0
    %502 = vmatprep.subr.mxu0 0.0
    %503 = vmatpush1.msra.mxu0 0.0
    %504 = vmatprep.subr.mxu0 0.0
    %505 = vmatpush1.msra.mxu0 %v448
    %506 = vmatprep.subr.mxu0 0.0
    %507 = vmatpush1.msra.mxu0 %v447
    %508 = vmatprep.subr.mxu0 0.0
    %509 = vmatpush1.msra.mxu0 %v446
    %510 = vmatprep.subr.mxu0 0.0
    %511 = vmatpush1.msra.mxu0 %v445
    %512 = vmatprep.subr.mxu0 0.0
    %513 = vmatpush2.msra.mxu0 0.0
    %514 = vmatprep.subr.mxu0 0.0
    %515 = vmatpush2.msra.mxu0 0.0
    %516 = vmatprep.subr.mxu0 0.0
    %517 = vmatpush2.msra.mxu0 0.0
    %518 = vmatprep.subr.mxu0 0.0
    %519 = vmatpush2.msra.mxu0 0.0
    %520 = vmatprep.subr.mxu0 0.0
    %521 = vmatpush2.msra.mxu0 0.0
    %522 = vmatprep.subr.mxu0 0.0
    %523 = vmatpush2.msra.mxu0 0.0
    %524 = vmatprep.subr.mxu0 0.0
    %525 = vmatpush2.msra.mxu0 0.0
    %526 = vmatprep.subr.mxu0 0.0
    %527 = vmatpush2.msra.mxu0 0.0
    %528 = vmatprep.subr.mxu0 0.0
    %529 = vmatpush2.msra.mxu0 0.0
    %530 = vmatprep.subr.mxu0 0.0
    %531 = vmatpush2.msra.mxu0 0.0
    %532 = vmatprep.subr.mxu0 0.0
    %533 = vmatpush2.msra.mxu0 0.0
    %534 = vmatprep.subr.mxu0 0.0
    %535 = vmatpush2.msra.mxu0 0.0
    %536 = vmatprep.subr.mxu0 0.0
    %537 = vmatpush2.msra.mxu0 0.0
    %538 = vmatprep.subr.mxu0 0.0
    %539 = vmatpush2.msra.mxu0 0.0
    %540 = vmatprep.subr.mxu0 0.0
    %541 = vmatpush2.msra.mxu0 0.0
    %542 = vmatprep.subr.mxu0 0.0
    %543 = vmatpush2.msra.mxu0 0.0
    %544 = vmatprep.mubr.f32.mxu0 0.0
    %545 = vmatmul.mubr.f32.gmra.mxu0 %v457
    %v546 = vpop.f32.mrf.mxu0
    %v547 = vadd.f32 %v454, %v546
    %v548 = vpop.f32.mrf.mxu0
    %549 = vmatprep.mubr.f32.mxu0 0.0
    %550 = vmatmul.mubr.f32.gmra.mxu0 %v460
    %v551 = vpop.f32.mrf.mxu0
    %v552 = vadd.f32 %v454, %v551
    %v553 = vpop.f32.mrf.mxu0
    %554 = vmatprep.mubr.f32.mxu0 0.0
    %555 = vmatmul.mubr.f32.gmra.mxu0 %v463
    %v556 = vpop.f32.mrf.mxu0
    %v557 = vadd.f32 %v454, %v556
    %v558 = vpop.f32.mrf.mxu0
    %559 = vmatprep.mubr.f32.mxu0 0.0
    %560 = vmatmul.mubr.f32.gmra.mxu0 %v466
    %v561 = vpop.f32.mrf.mxu0
    %v562 = vadd.f32 %v454, %v561
    %v563 = vpop.f32.mrf.mxu0
    %564 = vmatprep.mubr.f32.mxu0 0.0
    %565 = vmatmul.mubr.f32.gmra.mxu0 %v469
    %v566 = vpop.f32.mrf.mxu0
    %v567 = vadd.f32 %v454, %v566
    %v568 = vpop.f32.mrf.mxu0
    %569 = vmatprep.mubr.f32.mxu0 0.0
    %570 = vmatmul.mubr.f32.gmra.mxu0 %v472
    %v571 = vpop.f32.mrf.mxu0
    %v572 = vadd.f32 %v454, %v571
    %v573 = vpop.f32.mrf.mxu0
    %574 = vmatprep.mubr.f32.mxu0 0.0
    %575 = vmatmul.mubr.f32.gmra.mxu0 %v475
    %v576 = vpop.f32.mrf.mxu0
    %v577 = vadd.f32 %v454, %v576
    %v578 = vpop.f32.mrf.mxu0
    %579 = vmatprep.mubr.f32.mxu0 0.0
    %580 = vmatmul.mubr.f32.gmra.mxu0 %v478
    %v581 = vpop.f32.mrf.mxu0
    %v582 = vadd.f32 %v454, %v581
    %v583 = vpop.f32.mrf.mxu0
    %584 = vdwg.mxu0
    %585 = vst [vmem:[#allocation2] sm:$0xff] %v547
    %586 = vst [vmem:[#allocation2 + $0x8] sm:$0xff] %v552
    %587 = vst [vmem:[#allocation2 + $0x10] sm:$0xff] %v557
    %588 = vst [vmem:[#allocation2 + $0x18] sm:$0xff] %v562
    %589 = vst [vmem:[#allocation2 + $0x20] sm:$0xff] %v567
    %590 = vst [vmem:[#allocation2 + $0x28] sm:$0xff] %v572
    %591 = vst [vmem:[#allocation2 + $0x30] sm:$0xff] %v577
    %592 = vst [vmem:[#allocation2 + $0x38] sm:$0xff] %v582
    %v593 = vld [vmem:[#allocation11] sm:$0xff]
    %v594 = vld [vmem:[#allocation11 + $0x8] sm:$0xff]
    %v595 = vld [vmem:[#allocation11 + $0x10] sm:$0xff]
    %v596 = vld [vmem:[#allocation11 + $0x18] sm:$0xff]
    %v597 = vld [vmem:[#allocation2] sm:$0xff]
    %v599 = vsel %vm307, 0.0, 0
    %601 = vmatprep.subr.mxu0 0.0
    %602 = vmatpush1.msra.mxu0 0.0
    %603 = vmatprep.subr.mxu0 0.0
    %604 = vmatpush1.msra.mxu0 0.0
    %605 = vmatprep.subr.mxu0 0.0
    %606 = vmatpush1.msra.mxu0 0.0
    %607 = vmatprep.subr.mxu0 0.0
    %608 = vmatpush1.msra.mxu0 0.0
    %609 = vmatprep.subr.mxu0 0.0
    %610 = vmatpush1.msra.mxu0 0.0
    %611 = vmatprep.subr.mxu0 0.0
    %612 = vmatpush1.msra.mxu0 0.0
    %613 = vmatprep.subr.mxu0 0.0
    %614 = vmatpush1.msra.mxu0 0.0
    %615 = vmatprep.subr.mxu0 0.0
    %616 = vmatpush1.msra.mxu0 0.0
    %617 = vmatprep.subr.mxu0 0.0
    %618 = vmatpush1.msra.mxu0 0.0
    %619 = vmatprep.subr.mxu0 0.0
    %620 = vmatpush1.msra.mxu0 0.0
    %621 = vmatprep.subr.mxu0 0.0
    %622 = vmatpush1.msra.mxu0 0.0
    %623 = vmatprep.subr.mxu0 0.0
    %624 = vmatpush1.msra.mxu0 0.0
    %625 = vmatprep.subr.mxu0 0.0
    %626 = vmatpush1.msra.mxu0 %v596
    %627 = vmatprep.subr.mxu0 0.0
    %628 = vmatpush1.msra.mxu0 %v595
    %629 = vmatprep.subr.mxu0 0.0
    %630 = vmatpush1.msra.mxu0 %v594
    %631 = vmatprep.subr.mxu0 0.0
    %632 = vmatpush1.msra.mxu0 %v593
    %633 = vmatprep.subr.mxu0 0.0
    %634 = vmatpush2.msra.mxu0 0.0
    %635 = vmatprep.subr.mxu0 0.0
    %636 = vmatpush2.msra.mxu0 0.0
    %637 = vmatprep.subr.mxu0 0.0
    %638 = vmatpush2.msra.mxu0 0.0
    %639 = vmatprep.subr.mxu0 0.0
    %640 = vmatpush2.msra.mxu0 0.0
    %641 = vmatprep.subr.mxu0 0.0
    %642 = vmatpush2.msra.mxu0 0.0
    %643 = vmatprep.subr.mxu0 0.0
    %644 = vmatpush2.msra.mxu0 0.0
    %645 = vmatprep.subr.mxu0 0.0
    %646 = vmatpush2.msra.mxu0 0.0
    %647 = vmatprep.subr.mxu0 0.0
    %648 = vmatpush2.msra.mxu0 0.0
    %649 = vmatprep.subr.mxu0 0.0
    %650 = vmatpush2.msra.mxu0 0.0
    %651 = vmatprep.subr.mxu0 0.0
    %652 = vmatpush2.msra.mxu0 0.0
    %653 = vmatprep.subr.mxu0 0.0
    %654 = vmatpush2.msra.mxu0 0.0
    %655 = vmatprep.subr.mxu0 0.0
    %656 = vmatpush2.msra.mxu0 0.0
    %657 = vmatprep.subr.mxu0 0.0
    %658 = vmatpush2.msra.mxu0 0.0
    %659 = vmatprep.subr.mxu0 0.0
    %660 = vmatpush2.msra.mxu0 0.0
    %661 = vmatprep.subr.mxu0 0.0
    %662 = vmatpush2.msra.mxu0 0.0
    %663 = vmatprep.subr.mxu0 0.0
    %664 = vmatpush2.msra.mxu0 0.0
    %665 = vmatprep.mubr.f32.mxu0 0.0
    %666 = vmatmul.mubr.f32.gmra.mxu0 %v599
    %v667 = vpop.f32.mrf.mxu0
    %v668 = vadd.f32 0.0, %v667
    %v669 = vpop.f32.mrf.mxu0
    %670 = vdwg.mxu0
    %v671 = vadd.f32 %v597, %v668
    %v672 = vxor.u32 %v671, 2147483648
    %v673 = vmul.f32 %v672, 1.442695
    %v674 = vpow.pop %v673
    %v675 = vadd.f32 %v674, 1.0
    %v676 = vrcp.pop %v675
    %v677 = vmul.f32 1.0, %v676
    %v678 = vtanh.pop %v671
    %v679 = vmul.f32 %v677, 0.0
    %681 = vrot.lane.b32.xlu0 %v678, 64
    %v682 = vpop.permute.xlu0 %681
    %v684 = vmul.f32 %v677, %v682
    %686 = vrot.lane.b32.xlu0 %v684, 32
    %v687 = vpop.permute.xlu0 %686
    %v689 = vadd.f32 %v679, %v687
    %v690 = vtanh.pop %v689
    %692 = vrot.lane.b32.xlu0 %v690, 64
    %v693 = vpop.permute.xlu0 %692
    %v695 = vmul.f32 %v677, %v693
    %s696 = scalar_lea.vmem [#allocation2], 8
    %v697 = vld [vmem:[%s696] sm:$0xff]
    %699 = vrot.lane.b32.xlu0 %v695, 32
    %v700 = vpop.permute.xlu0 %699
    %v701 = vsel %vm307, %v700, 0
    %703 = vmatprep.subr.mxu0 0.0
    %704 = vmatpush1.msra.mxu0 0.0
    %705 = vmatprep.subr.mxu0 0.0
    %706 = vmatpush1.msra.mxu0 0.0
    %707 = vmatprep.subr.mxu0 0.0
    %708 = vmatpush1.msra.mxu0 0.0
    %709 = vmatprep.subr.mxu0 0.0
    %710 = vmatpush1.msra.mxu0 0.0
    %711 = vmatprep.subr.mxu0 0.0
    %712 = vmatpush1.msra.mxu0 0.0
    %713 = vmatprep.subr.mxu0 0.0
    %714 = vmatpush1.msra.mxu0 0.0
    %715 = vmatprep.subr.mxu0 0.0
    %716 = vmatpush1.msra.mxu0 0.0
    %717 = vmatprep.subr.mxu0 0.0
    %718 = vmatpush1.msra.mxu0 0.0
    %719 = vmatprep.subr.mxu0 0.0
    %720 = vmatpush1.msra.mxu0 0.0
    %721 = vmatprep.subr.mxu0 0.0
    %722 = vmatpush1.msra.mxu0 0.0
    %723 = vmatprep.subr.mxu0 0.0
    %724 = vmatpush1.msra.mxu0 0.0
    %725 = vmatprep.subr.mxu0 0.0
    %726 = vmatpush1.msra.mxu0 0.0
    %727 = vmatprep.subr.mxu0 0.0
    %728 = vmatpush1.msra.mxu0 %v596
    %729 = vmatprep.subr.mxu0 0.0
    %730 = vmatpush1.msra.mxu0 %v595
    %731 = vmatprep.subr.mxu0 0.0
    %732 = vmatpush1.msra.mxu0 %v594
    %733 = vmatprep.subr.mxu0 0.0
    %734 = vmatpush1.msra.mxu0 %v593
    %735 = vmatprep.subr.mxu0 0.0
    %736 = vmatpush2.msra.mxu0 0.0
    %737 = vmatprep.subr.mxu0 0.0
    %738 = vmatpush2.msra.mxu0 0.0
    %739 = vmatprep.subr.mxu0 0.0
    %740 = vmatpush2.msra.mxu0 0.0
    %741 = vmatprep.subr.mxu0 0.0
    %742 = vmatpush2.msra.mxu0 0.0
    %743 = vmatprep.subr.mxu0 0.0
    %744 = vmatpush2.msra.mxu0 0.0
    %745 = vmatprep.subr.mxu0 0.0
    %746 = vmatpush2.msra.mxu0 0.0
    %747 = vmatprep.subr.mxu0 0.0
    %748 = vmatpush2.msra.mxu0 0.0
    %749 = vmatprep.subr.mxu0 0.0
    %750 = vmatpush2.msra.mxu0 0.0
    %751 = vmatprep.subr.mxu0 0.0
    %752 = vmatpush2.msra.mxu0 0.0
    %753 = vmatprep.subr.mxu0 0.0
    %754 = vmatpush2.msra.mxu0 0.0
    %755 = vmatprep.subr.mxu0 0.0
    %756 = vmatpush2.msra.mxu0 0.0
    %757 = vmatprep.subr.mxu0 0.0
    %758 = vmatpush2.msra.mxu0 0.0
    %759 = vmatprep.subr.mxu0 0.0
    %760 = vmatpush2.msra.mxu0 0.0
    %761 = vmatprep.subr.mxu0 0.0
    %762 = vmatpush2.msra.mxu0 0.0
    %763 = vmatprep.subr.mxu0 0.0
    %764 = vmatpush2.msra.mxu0 0.0
    %765 = vmatprep.subr.mxu0 0.0
    %766 = vmatpush2.msra.mxu0 0.0
    %767 = vmatprep.mubr.f32.mxu0 0.0
    %768 = vmatmul.mubr.f32.gmra.mxu0 %v701
    %v769 = vpop.f32.mrf.mxu0
    %v770 = vadd.f32 0.0, %v769
    %v771 = vpop.f32.mrf.mxu0
    %772 = vdwg.mxu0
    %v773 = vadd.f32 %v697, %v770
    %v774 = vxor.u32 %v773, 2147483648
    %v775 = vmul.f32 %v774, 1.442695
    %v776 = vpow.pop %v775
    %v777 = vadd.f32 %v776, 1.0
    %v778 = vrcp.pop %v777
    %v779 = vmul.f32 1.0, %v778
    %v780 = vtanh.pop %v773
    %v781 = vmul.f32 %v779, %v689
    %783 = vrot.lane.b32.xlu0 %v780, 64
    %v784 = vpop.permute.xlu0 %783
    %v786 = vmul.f32 %v779, %v784
    %788 = vrot.lane.b32.xlu0 %v786, 32
    %v789 = vpop.permute.xlu0 %788
    %v791 = vadd.f32 %v781, %v789
    %v792 = vtanh.pop %v791
    %794 = vrot.lane.b32.xlu0 %v792, 64
    %v795 = vpop.permute.xlu0 %794
    %v797 = vmul.f32 %v779, %v795
    %s798 = scalar_lea.vmem [#allocation2], 16
    %v799 = vld [vmem:[%s798] sm:$0xff]
    %801 = vrot.lane.b32.xlu0 %v797, 32
    %v802 = vpop.permute.xlu0 %801
    %v803 = vsel %vm307, %v802, 0
    %805 = vmatprep.subr.mxu0 0.0
    %806 = vmatpush1.msra.mxu0 0.0
    %807 = vmatprep.subr.mxu0 0.0
    %808 = vmatpush1.msra.mxu0 0.0
    %809 = vmatprep.subr.mxu0 0.0
    %810 = vmatpush1.msra.mxu0 0.0
    %811 = vmatprep.subr.mxu0 0.0
    %812 = vmatpush1.msra.mxu0 0.0
    %813 = vmatprep.subr.mxu0 0.0
    %814 = vmatpush1.msra.mxu0 0.0
    %815 = vmatprep.subr.mxu0 0.0
    %816 = vmatpush1.msra.mxu0 0.0
    %817 = vmatprep.subr.mxu0 0.0
    %818 = vmatpush1.msra.mxu0 0.0
    %819 = vmatprep.subr.mxu0 0.0
    %820 = vmatpush1.msra.mxu0 0.0
    %821 = vmatprep.subr.mxu0 0.0
    %822 = vmatpush1.msra.mxu0 0.0
    %823 = vmatprep.subr.mxu0 0.0
    %824 = vmatpush1.msra.mxu0 0.0
    %825 = vmatprep.subr.mxu0 0.0
    %826 = vmatpush1.msra.mxu0 0.0
    %827 = vmatprep.subr.mxu0 0.0
    %828 = vmatpush1.msra.mxu0 0.0
    %829 = vmatprep.subr.mxu0 0.0
    %830 = vmatpush1.msra.mxu0 %v596
    %831 = vmatprep.subr.mxu0 0.0
    %832 = vmatpush1.msra.mxu0 %v595
    %833 = vmatprep.subr.mxu0 0.0
    %834 = vmatpush1.msra.mxu0 %v594
    %835 = vmatprep.subr.mxu0 0.0
    %836 = vmatpush1.msra.mxu0 %v593
    %837 = vmatprep.subr.mxu0 0.0
    %838 = vmatpush2.msra.mxu0 0.0
    %839 = vmatprep.subr.mxu0 0.0
    %840 = vmatpush2.msra.mxu0 0.0
    %841 = vmatprep.subr.mxu0 0.0
    %842 = vmatpush2.msra.mxu0 0.0
    %843 = vmatprep.subr.mxu0 0.0
    %844 = vmatpush2.msra.mxu0 0.0
    %845 = vmatprep.subr.mxu0 0.0
    %846 = vmatpush2.msra.mxu0 0.0
    %847 = vmatprep.subr.mxu0 0.0
    %848 = vmatpush2.msra.mxu0 0.0
    %849 = vmatprep.subr.mxu0 0.0
    %850 = vmatpush2.msra.mxu0 0.0
    %851 = vmatprep.subr.mxu0 0.0
    %852 = vmatpush2.msra.mxu0 0.0
    %853 = vmatprep.subr.mxu0 0.0
    %854 = vmatpush2.msra.mxu0 0.0
    %855 = vmatprep.subr.mxu0 0.0
    %856 = vmatpush2.msra.mxu0 0.0
    %857 = vmatprep.subr.mxu0 0.0
    %858 = vmatpush2.msra.mxu0 0.0
    %859 = vmatprep.subr.mxu0 0.0
    %860 = vmatpush2.msra.mxu0 0.0
    %861 = vmatprep.subr.mxu0 0.0
    %862 = vmatpush2.msra.mxu0 0.0
    %863 = vmatprep.subr.mxu0 0.0
    %864 = vmatpush2.msra.mxu0 0.0
    %865 = vmatprep.subr.mxu0 0.0
    %866 = vmatpush2.msra.mxu0 0.0
    %867 = vmatprep.subr.mxu0 0.0
    %868 = vmatpush2.msra.mxu0 0.0
    %869 = vmatprep.mubr.f32.mxu0 0.0
    %870 = vmatmul.mubr.f32.gmra.mxu0 %v803
    %v871 = vpop.f32.mrf.mxu0
    %v872 = vadd.f32 0.0, %v871
    %v873 = vpop.f32.mrf.mxu0
    %874 = vdwg.mxu0
    %v875 = vadd.f32 %v799, %v872
    %v876 = vxor.u32 %v875, 2147483648
    %v877 = vmul.f32 %v876, 1.442695
    %v878 = vpow.pop %v877
    %v879 = vadd.f32 %v878, 1.0
    %v880 = vrcp.pop %v879
    %v881 = vmul.f32 1.0, %v880
    %v882 = vtanh.pop %v875
    %v883 = vmul.f32 %v881, %v791
    %885 = vrot.lane.b32.xlu0 %v882, 64
    %v886 = vpop.permute.xlu0 %885
    %v888 = vmul.f32 %v881, %v886
    %890 = vrot.lane.b32.xlu0 %v888, 32
    %v891 = vpop.permute.xlu0 %890
    %v893 = vadd.f32 %v883, %v891
    %v894 = vtanh.pop %v893
    %896 = vrot.lane.b32.xlu0 %v894, 64
    %v897 = vpop.permute.xlu0 %896
    %v899 = vmul.f32 %v881, %v897
    %s900 = scalar_lea.vmem [#allocation2], 24
    %v901 = vld [vmem:[%s900] sm:$0xff]
    %903 = vrot.lane.b32.xlu0 %v899, 32
    %v904 = vpop.permute.xlu0 %903
    %v905 = vsel %vm307, %v904, 0
    %907 = vmatprep.subr.mxu0 0.0
    %908 = vmatpush1.msra.mxu0 0.0
    %909 = vmatprep.subr.mxu0 0.0
    %910 = vmatpush1.msra.mxu0 0.0
    %911 = vmatprep.subr.mxu0 0.0
    %912 = vmatpush1.msra.mxu0 0.0
    %913 = vmatprep.subr.mxu0 0.0
    %914 = vmatpush1.msra.mxu0 0.0
    %915 = vmatprep.subr.mxu0 0.0
    %916 = vmatpush1.msra.mxu0 0.0
    %917 = vmatprep.subr.mxu0 0.0
    %918 = vmatpush1.msra.mxu0 0.0
    %919 = vmatprep.subr.mxu0 0.0
    %920 = vmatpush1.msra.mxu0 0.0
    %921 = vmatprep.subr.mxu0 0.0
    %922 = vmatpush1.msra.mxu0 0.0
    %923 = vmatprep.subr.mxu0 0.0
    %924 = vmatpush1.msra.mxu0 0.0
    %925 = vmatprep.subr.mxu0 0.0
    %926 = vmatpush1.msra.mxu0 0.0
    %927 = vmatprep.subr.mxu0 0.0
    %928 = vmatpush1.msra.mxu0 0.0
    %929 = vmatprep.subr.mxu0 0.0
    %930 = vmatpush1.msra.mxu0 0.0
    %931 = vmatprep.subr.mxu0 0.0
    %932 = vmatpush1.msra.mxu0 %v596
    %933 = vmatprep.subr.mxu0 0.0
    %934 = vmatpush1.msra.mxu0 %v595
    %935 = vmatprep.subr.mxu0 0.0
    %936 = vmatpush1.msra.mxu0 %v594
    %937 = vmatprep.subr.mxu0 0.0
    %938 = vmatpush1.msra.mxu0 %v593
    %939 = vmatprep.subr.mxu0 0.0
    %940 = vmatpush2.msra.mxu0 0.0
    %941 = vmatprep.subr.mxu0 0.0
    %942 = vmatpush2.msra.mxu0 0.0
    %943 = vmatprep.subr.mxu0 0.0
    %944 = vmatpush2.msra.mxu0 0.0
    %945 = vmatprep.subr.mxu0 0.0
    %946 = vmatpush2.msra.mxu0 0.0
    %947 = vmatprep.subr.mxu0 0.0
    %948 = vmatpush2.msra.mxu0 0.0
    %949 = vmatprep.subr.mxu0 0.0
    %950 = vmatpush2.msra.mxu0 0.0
    %951 = vmatprep.subr.mxu0 0.0
    %952 = vmatpush2.msra.mxu0 0.0
    %953 = vmatprep.subr.mxu0 0.0
    %954 = vmatpush2.msra.mxu0 0.0
    %955 = vmatprep.subr.mxu0 0.0
    %956 = vmatpush2.msra.mxu0 0.0
    %957 = vmatprep.subr.mxu0 0.0
    %958 = vmatpush2.msra.mxu0 0.0
    %959 = vmatprep.subr.mxu0 0.0
    %960 = vmatpush2.msra.mxu0 0.0
    %961 = vmatprep.subr.mxu0 0.0
    %962 = vmatpush2.msra.mxu0 0.0
    %963 = vmatprep.subr.mxu0 0.0
    %964 = vmatpush2.msra.mxu0 0.0
    %965 = vmatprep.subr.mxu0 0.0
    %966 = vmatpush2.msra.mxu0 0.0
    %967 = vmatprep.subr.mxu0 0.0
    %968 = vmatpush2.msra.mxu0 0.0
    %969 = vmatprep.subr.mxu0 0.0
    %970 = vmatpush2.msra.mxu0 0.0
    %971 = vmatprep.mubr.f32.mxu0 0.0
    %972 = vmatmul.mubr.f32.gmra.mxu0 %v905
    %v973 = vpop.f32.mrf.mxu0
    %v974 = vadd.f32 0.0, %v973
    %v975 = vpop.f32.mrf.mxu0
    %976 = vdwg.mxu0
    %v977 = vadd.f32 %v901, %v974
    %v978 = vxor.u32 %v977, 2147483648
    %v979 = vmul.f32 %v978, 1.442695
    %v980 = vpow.pop %v979
    %v981 = vadd.f32 %v980, 1.0
    %v982 = vrcp.pop %v981
    %v983 = vmul.f32 1.0, %v982
    %v984 = vtanh.pop %v977
    %v985 = vmul.f32 %v983, %v893
    %987 = vrot.lane.b32.xlu0 %v984, 64
    %v988 = vpop.permute.xlu0 %987
    %v990 = vmul.f32 %v983, %v988
    %992 = vrot.lane.b32.xlu0 %v990, 32
    %v993 = vpop.permute.xlu0 %992
    %v995 = vadd.f32 %v985, %v993
    %v996 = vtanh.pop %v995
    %998 = vrot.lane.b32.xlu0 %v996, 64
    %v999 = vpop.permute.xlu0 %998
    %v1001 = vmul.f32 %v983, %v999
    %s1002 = scalar_lea.vmem [#allocation2], 32
    %v1003 = vld [vmem:[%s1002] sm:$0xff]
    %1005 = vrot.lane.b32.xlu0 %v1001, 32
    %v1006 = vpop.permute.xlu0 %1005
    %v1007 = vsel %vm307, %v1006, 0
    %1009 = vmatprep.subr.mxu0 0.0
    %1010 = vmatpush1.msra.mxu0 0.0
    %1011 = vmatprep.subr.mxu0 0.0
    %1012 = vmatpush1.msra.mxu0 0.0
    %1013 = vmatprep.subr.mxu0 0.0
    %1014 = vmatpush1.msra.mxu0 0.0
    %1015 = vmatprep.subr.mxu0 0.0
    %1016 = vmatpush1.msra.mxu0 0.0
    %1017 = vmatprep.subr.mxu0 0.0
    %1018 = vmatpush1.msra.mxu0 0.0
    %1019 = vmatprep.subr.mxu0 0.0
    %1020 = vmatpush1.msra.mxu0 0.0
    %1021 = vmatprep.subr.mxu0 0.0
    %1022 = vmatpush1.msra.mxu0 0.0
    %1023 = vmatprep.subr.mxu0 0.0
    %1024 = vmatpush1.msra.mxu0 0.0
    %1025 = vmatprep.subr.mxu0 0.0
    %1026 = vmatpush1.msra.mxu0 0.0
    %1027 = vmatprep.subr.mxu0 0.0
    %1028 = vmatpush1.msra.mxu0 0.0
    %1029 = vmatprep.subr.mxu0 0.0
    %1030 = vmatpush1.msra.mxu0 0.0
    %1031 = vmatprep.subr.mxu0 0.0
    %1032 = vmatpush1.msra.mxu0 0.0
    %1033 = vmatprep.subr.mxu0 0.0
    %1034 = vmatpush1.msra.mxu0 %v596
    %1035 = vmatprep.subr.mxu0 0.0
    %1036 = vmatpush1.msra.mxu0 %v595
    %1037 = vmatprep.subr.mxu0 0.0
    %1038 = vmatpush1.msra.mxu0 %v594
    %1039 = vmatprep.subr.mxu0 0.0
    %1040 = vmatpush1.msra.mxu0 %v593
    %1041 = vmatprep.subr.mxu0 0.0
    %1042 = vmatpush2.msra.mxu0 0.0
    %1043 = vmatprep.subr.mxu0 0.0
    %1044 = vmatpush2.msra.mxu0 0.0
    %1045 = vmatprep.subr.mxu0 0.0
    %1046 = vmatpush2.msra.mxu0 0.0
    %1047 = vmatprep.subr.mxu0 0.0
    %1048 = vmatpush2.msra.mxu0 0.0
    %1049 = vmatprep.subr.mxu0 0.0
    %1050 = vmatpush2.msra.mxu0 0.0
    %1051 = vmatprep.subr.mxu0 0.0
    %1052 = vmatpush2.msra.mxu0 0.0
    %1053 = vmatprep.subr.mxu0 0.0
    %1054 = vmatpush2.msra.mxu0 0.0
    %1055 = vmatprep.subr.mxu0 0.0
    %1056 = vmatpush2.msra.mxu0 0.0
    %1057 = vmatprep.subr.mxu0 0.0
    %1058 = vmatpush2.msra.mxu0 0.0
    %1059 = vmatprep.subr.mxu0 0.0
    %1060 = vmatpush2.msra.mxu0 0.0
    %1061 = vmatprep.subr.mxu0 0.0
    %1062 = vmatpush2.msra.mxu0 0.0
    %1063 = vmatprep.subr.mxu0 0.0
    %1064 = vmatpush2.msra.mxu0 0.0
    %1065 = vmatprep.subr.mxu0 0.0
    %1066 = vmatpush2.msra.mxu0 0.0
    %1067 = vmatprep.subr.mxu0 0.0
    %1068 = vmatpush2.msra.mxu0 0.0
    %1069 = vmatprep.subr.mxu0 0.0
    %1070 = vmatpush2.msra.mxu0 0.0
    %1071 = vmatprep.subr.mxu0 0.0
    %1072 = vmatpush2.msra.mxu0 0.0
    %1073 = vmatprep.mubr.f32.mxu0 0.0
    %1074 = vmatmul.mubr.f32.gmra.mxu0 %v1007
    %v1075 = vpop.f32.mrf.mxu0
    %v1076 = vadd.f32 0.0, %v1075
    %v1077 = vpop.f32.mrf.mxu0
    %1078 = vdwg.mxu0
    %v1079 = vadd.f32 %v1003, %v1076
    %v1080 = vxor.u32 %v1079, 2147483648
    %v1081 = vmul.f32 %v1080, 1.442695
    %v1082 = vpow.pop %v1081
    %v1083 = vadd.f32 %v1082, 1.0
    %v1084 = vrcp.pop %v1083
    %v1085 = vmul.f32 1.0, %v1084
    %v1086 = vtanh.pop %v1079
    %v1087 = vmul.f32 %v1085, %v995
    %1089 = vrot.lane.b32.xlu0 %v1086, 64
    %v1090 = vpop.permute.xlu0 %1089
    %v1092 = vmul.f32 %v1085, %v1090
    %1094 = vrot.lane.b32.xlu0 %v1092, 32
    %v1095 = vpop.permute.xlu0 %1094
    %v1097 = vadd.f32 %v1087, %v1095
    %v1098 = vtanh.pop %v1097
    %1100 = vrot.lane.b32.xlu0 %v1098, 64
    %v1101 = vpop.permute.xlu0 %1100
    %v1103 = vmul.f32 %v1085, %v1101
    %s1104 = scalar_lea.vmem [#allocation2], 40
    %v1105 = vld [vmem:[%s1104] sm:$0xff]
    %1107 = vrot.lane.b32.xlu0 %v1103, 32
    %v1108 = vpop.permute.xlu0 %1107
    %v1109 = vsel %vm307, %v1108, 0
    %1111 = vmatprep.subr.mxu0 0.0
    %1112 = vmatpush1.msra.mxu0 0.0
    %1113 = vmatprep.subr.mxu0 0.0
    %1114 = vmatpush1.msra.mxu0 0.0
    %1115 = vmatprep.subr.mxu0 0.0
    %1116 = vmatpush1.msra.mxu0 0.0
    %1117 = vmatprep.subr.mxu0 0.0
    %1118 = vmatpush1.msra.mxu0 0.0
    %1119 = vmatprep.subr.mxu0 0.0
    %1120 = vmatpush1.msra.mxu0 0.0
    %1121 = vmatprep.subr.mxu0 0.0
    %1122 = vmatpush1.msra.mxu0 0.0
    %1123 = vmatprep.subr.mxu0 0.0
    %1124 = vmatpush1.msra.mxu0 0.0
    %1125 = vmatprep.subr.mxu0 0.0
    %1126 = vmatpush1.msra.mxu0 0.0
    %1127 = vmatprep.subr.mxu0 0.0
    %1128 = vmatpush1.msra.mxu0 0.0
    %1129 = vmatprep.subr.mxu0 0.0
    %1130 = vmatpush1.msra.mxu0 0.0
    %1131 = vmatprep.subr.mxu0 0.0
    %1132 = vmatpush1.msra.mxu0 0.0
    %1133 = vmatprep.subr.mxu0 0.0
    %1134 = vmatpush1.msra.mxu0 0.0
    %1135 = vmatprep.subr.mxu0 0.0
    %1136 = vmatpush1.msra.mxu0 %v596
    %1137 = vmatprep.subr.mxu0 0.0
    %1138 = vmatpush1.msra.mxu0 %v595
    %1139 = vmatprep.subr.mxu0 0.0
    %1140 = vmatpush1.msra.mxu0 %v594
    %1141 = vmatprep.subr.mxu0 0.0
    %1142 = vmatpush1.msra.mxu0 %v593
    %1143 = vmatprep.subr.mxu0 0.0
    %1144 = vmatpush2.msra.mxu0 0.0
    %1145 = vmatprep.subr.mxu0 0.0
    %1146 = vmatpush2.msra.mxu0 0.0
    %1147 = vmatprep.subr.mxu0 0.0
    %1148 = vmatpush2.msra.mxu0 0.0
    %1149 = vmatprep.subr.mxu0 0.0
    %1150 = vmatpush2.msra.mxu0 0.0
    %1151 = vmatprep.subr.mxu0 0.0
    %1152 = vmatpush2.msra.mxu0 0.0
    %1153 = vmatprep.subr.mxu0 0.0
    %1154 = vmatpush2.msra.mxu0 0.0
    %1155 = vmatprep.subr.mxu0 0.0
    %1156 = vmatpush2.msra.mxu0 0.0
    %1157 = vmatprep.subr.mxu0 0.0
    %1158 = vmatpush2.msra.mxu0 0.0
    %1159 = vmatprep.subr.mxu0 0.0
    %1160 = vmatpush2.msra.mxu0 0.0
    %1161 = vmatprep.subr.mxu0 0.0
    %1162 = vmatpush2.msra.mxu0 0.0
    %1163 = vmatprep.subr.mxu0 0.0
    %1164 = vmatpush2.msra.mxu0 0.0
    %1165 = vmatprep.subr.mxu0 0.0
    %1166 = vmatpush2.msra.mxu0 0.0
    %1167 = vmatprep.subr.mxu0 0.0
    %1168 = vmatpush2.msra.mxu0 0.0
    %1169 = vmatprep.subr.mxu0 0.0
    %1170 = vmatpush2.msra.mxu0 0.0
    %1171 = vmatprep.subr.mxu0 0.0
    %1172 = vmatpush2.msra.mxu0 0.0
    %1173 = vmatprep.subr.mxu0 0.0
    %1174 = vmatpush2.msra.mxu0 0.0
    %1175 = vmatprep.mubr.f32.mxu0 0.0
    %1176 = vmatmul.mubr.f32.gmra.mxu0 %v1109
    %v1177 = vpop.f32.mrf.mxu0
    %v1178 = vadd.f32 0.0, %v1177
    %v1179 = vpop.f32.mrf.mxu0
    %1180 = vdwg.mxu0
    %v1181 = vadd.f32 %v1105, %v1178
    %v1182 = vxor.u32 %v1181, 2147483648
    %v1183 = vmul.f32 %v1182, 1.442695
    %v1184 = vpow.pop %v1183
    %v1185 = vadd.f32 %v1184, 1.0
    %v1186 = vrcp.pop %v1185
    %v1187 = vmul.f32 1.0, %v1186
    %v1188 = vtanh.pop %v1181
    %v1189 = vmul.f32 %v1187, %v1097
    %1191 = vrot.lane.b32.xlu0 %v1188, 64
    %v1192 = vpop.permute.xlu0 %1191
    %v1194 = vmul.f32 %v1187, %v1192
    %1196 = vrot.lane.b32.xlu0 %v1194, 32
    %v1197 = vpop.permute.xlu0 %1196
    %v1199 = vadd.f32 %v1189, %v1197
    %v1200 = vtanh.pop %v1199
    %1202 = vrot.lane.b32.xlu0 %v1200, 64
    %v1203 = vpop.permute.xlu0 %1202
    %v1205 = vmul.f32 %v1187, %v1203
    %s1206 = scalar_lea.vmem [#allocation2], 48
    %v1207 = vld [vmem:[%s1206] sm:$0xff]
    %1209 = vrot.lane.b32.xlu0 %v1205, 32
    %v1210 = vpop.permute.xlu0 %1209
    %v1211 = vsel %vm307, %v1210, 0
    %1213 = vmatprep.subr.mxu0 0.0
    %1214 = vmatpush1.msra.mxu0 0.0
    %1215 = vmatprep.subr.mxu0 0.0
    %1216 = vmatpush1.msra.mxu0 0.0
    %1217 = vmatprep.subr.mxu0 0.0
    %1218 = vmatpush1.msra.mxu0 0.0
    %1219 = vmatprep.subr.mxu0 0.0
    %1220 = vmatpush1.msra.mxu0 0.0
    %1221 = vmatprep.subr.mxu0 0.0
    %1222 = vmatpush1.msra.mxu0 0.0
    %1223 = vmatprep.subr.mxu0 0.0
    %1224 = vmatpush1.msra.mxu0 0.0
    %1225 = vmatprep.subr.mxu0 0.0
    %1226 = vmatpush1.msra.mxu0 0.0
    %1227 = vmatprep.subr.mxu0 0.0
    %1228 = vmatpush1.msra.mxu0 0.0
    %1229 = vmatprep.subr.mxu0 0.0
    %1230 = vmatpush1.msra.mxu0 0.0
    %1231 = vmatprep.subr.mxu0 0.0
    %1232 = vmatpush1.msra.mxu0 0.0
    %1233 = vmatprep.subr.mxu0 0.0
    %1234 = vmatpush1.msra.mxu0 0.0
    %1235 = vmatprep.subr.mxu0 0.0
    %1236 = vmatpush1.msra.mxu0 0.0
    %1237 = vmatprep.subr.mxu0 0.0
    %1238 = vmatpush1.msra.mxu0 %v596
    %1239 = vmatprep.subr.mxu0 0.0
    %1240 = vmatpush1.msra.mxu0 %v595
    %1241 = vmatprep.subr.mxu0 0.0
    %1242 = vmatpush1.msra.mxu0 %v594
    %1243 = vmatprep.subr.mxu0 0.0
    %1244 = vmatpush1.msra.mxu0 %v593
    %1245 = vmatprep.subr.mxu0 0.0
    %1246 = vmatpush2.msra.mxu0 0.0
    %1247 = vmatprep.subr.mxu0 0.0
    %1248 = vmatpush2.msra.mxu0 0.0
    %1249 = vmatprep.subr.mxu0 0.0
    %1250 = vmatpush2.msra.mxu0 0.0
    %1251 = vmatprep.subr.mxu0 0.0
    %1252 = vmatpush2.msra.mxu0 0.0
    %1253 = vmatprep.subr.mxu0 0.0
    %1254 = vmatpush2.msra.mxu0 0.0
    %1255 = vmatprep.subr.mxu0 0.0
    %1256 = vmatpush2.msra.mxu0 0.0
    %1257 = vmatprep.subr.mxu0 0.0
    %1258 = vmatpush2.msra.mxu0 0.0
    %1259 = vmatprep.subr.mxu0 0.0
    %1260 = vmatpush2.msra.mxu0 0.0
    %1261 = vmatprep.subr.mxu0 0.0
    %1262 = vmatpush2.msra.mxu0 0.0
    %1263 = vmatprep.subr.mxu0 0.0
    %1264 = vmatpush2.msra.mxu0 0.0
    %1265 = vmatprep.subr.mxu0 0.0
    %1266 = vmatpush2.msra.mxu0 0.0
    %1267 = vmatprep.subr.mxu0 0.0
    %1268 = vmatpush2.msra.mxu0 0.0
    %1269 = vmatprep.subr.mxu0 0.0
    %1270 = vmatpush2.msra.mxu0 0.0
    %1271 = vmatprep.subr.mxu0 0.0
    %1272 = vmatpush2.msra.mxu0 0.0
    %1273 = vmatprep.subr.mxu0 0.0
    %1274 = vmatpush2.msra.mxu0 0.0
    %1275 = vmatprep.subr.mxu0 0.0
    %1276 = vmatpush2.msra.mxu0 0.0
    %1277 = vmatprep.mubr.f32.mxu0 0.0
    %1278 = vmatmul.mubr.f32.gmra.mxu0 %v1211
    %v1279 = vpop.f32.mrf.mxu0
    %v1280 = vadd.f32 0.0, %v1279
    %v1281 = vpop.f32.mrf.mxu0
    %1282 = vdwg.mxu0
    %v1283 = vadd.f32 %v1207, %v1280
    %v1284 = vxor.u32 %v1283, 2147483648
    %v1285 = vmul.f32 %v1284, 1.442695
    %v1286 = vpow.pop %v1285
    %v1287 = vadd.f32 %v1286, 1.0
    %v1288 = vrcp.pop %v1287
    %v1289 = vmul.f32 1.0, %v1288
    %v1290 = vtanh.pop %v1283
    %v1291 = vmul.f32 %v1289, %v1199
    %1293 = vrot.lane.b32.xlu0 %v1290, 64
    %v1294 = vpop.permute.xlu0 %1293
    %v1296 = vmul.f32 %v1289, %v1294
    %1298 = vrot.lane.b32.xlu0 %v1296, 32
    %v1299 = vpop.permute.xlu0 %1298
    %v1301 = vadd.f32 %v1291, %v1299
    %v1302 = vtanh.pop %v1301
    %1304 = vrot.lane.b32.xlu0 %v1302, 64
    %v1305 = vpop.permute.xlu0 %1304
    %v1307 = vmul.f32 %v1289, %v1305
    %s1308 = scalar_lea.vmem [#allocation2], 56
    %v1309 = vld [vmem:[%s1308] sm:$0xff]
    %1311 = vrot.lane.b32.xlu0 %v1307, 32
    %v1312 = vpop.permute.xlu0 %1311
    %v1313 = vsel %vm307, %v1312, 0
    %1315 = vmatprep.subr.mxu0 0.0
    %1316 = vmatpush1.msra.mxu0 0.0
    %1317 = vmatprep.subr.mxu0 0.0
    %1318 = vmatpush1.msra.mxu0 0.0
    %1319 = vmatprep.subr.mxu0 0.0
    %1320 = vmatpush1.msra.mxu0 0.0
    %1321 = vmatprep.subr.mxu0 0.0
    %1322 = vmatpush1.msra.mxu0 0.0
    %1323 = vmatprep.subr.mxu0 0.0
    %1324 = vmatpush1.msra.mxu0 0.0
    %1325 = vmatprep.subr.mxu0 0.0
    %1326 = vmatpush1.msra.mxu0 0.0
    %1327 = vmatprep.subr.mxu0 0.0
    %1328 = vmatpush1.msra.mxu0 0.0
    %1329 = vmatprep.subr.mxu0 0.0
    %1330 = vmatpush1.msra.mxu0 0.0
    %1331 = vmatprep.subr.mxu0 0.0
    %1332 = vmatpush1.msra.mxu0 0.0
    %1333 = vmatprep.subr.mxu0 0.0
    %1334 = vmatpush1.msra.mxu0 0.0
    %1335 = vmatprep.subr.mxu0 0.0
    %1336 = vmatpush1.msra.mxu0 0.0
    %1337 = vmatprep.subr.mxu0 0.0
    %1338 = vmatpush1.msra.mxu0 0.0
    %1339 = vmatprep.subr.mxu0 0.0
    %1340 = vmatpush1.msra.mxu0 %v596
    %1341 = vmatprep.subr.mxu0 0.0
    %1342 = vmatpush1.msra.mxu0 %v595
    %1343 = vmatprep.subr.mxu0 0.0
    %1344 = vmatpush1.msra.mxu0 %v594
    %1345 = vmatprep.subr.mxu0 0.0
    %1346 = vmatpush1.msra.mxu0 %v593
    %1347 = vmatprep.subr.mxu0 0.0
    %1348 = vmatpush2.msra.mxu0 0.0
    %1349 = vmatprep.subr.mxu0 0.0
    %1350 = vmatpush2.msra.mxu0 0.0
    %1351 = vmatprep.subr.mxu0 0.0
    %1352 = vmatpush2.msra.mxu0 0.0
    %1353 = vmatprep.subr.mxu0 0.0
    %1354 = vmatpush2.msra.mxu0 0.0
    %1355 = vmatprep.subr.mxu0 0.0
    %1356 = vmatpush2.msra.mxu0 0.0
    %1357 = vmatprep.subr.mxu0 0.0
    %1358 = vmatpush2.msra.mxu0 0.0
    %1359 = vmatprep.subr.mxu0 0.0
    %1360 = vmatpush2.msra.mxu0 0.0
    %1361 = vmatprep.subr.mxu0 0.0
    %1362 = vmatpush2.msra.mxu0 0.0
    %1363 = vmatprep.subr.mxu0 0.0
    %1364 = vmatpush2.msra.mxu0 0.0
    %1365 = vmatprep.subr.mxu0 0.0
    %1366 = vmatpush2.msra.mxu0 0.0
    %1367 = vmatprep.subr.mxu0 0.0
    %1368 = vmatpush2.msra.mxu0 0.0
    %1369 = vmatprep.subr.mxu0 0.0
    %1370 = vmatpush2.msra.mxu0 0.0
    %1371 = vmatprep.subr.mxu0 0.0
    %1372 = vmatpush2.msra.mxu0 0.0
    %1373 = vmatprep.subr.mxu0 0.0
    %1374 = vmatpush2.msra.mxu0 0.0
    %1375 = vmatprep.subr.mxu0 0.0
    %1376 = vmatpush2.msra.mxu0 0.0
    %1377 = vmatprep.subr.mxu0 0.0
    %1378 = vmatpush2.msra.mxu0 0.0
    %1379 = vmatprep.mubr.f32.mxu0 0.0
    %1380 = vmatmul.mubr.f32.gmra.mxu0 %v1313
    %v1381 = vpop.f32.mrf.mxu0
    %v1382 = vadd.f32 0.0, %v1381
    %v1383 = vpop.f32.mrf.mxu0
    %1384 = vdwg.mxu0
    %v1385 = vadd.f32 %v1309, %v1382
    %v1386 = vxor.u32 %v1385, 2147483648
    %v1387 = vmul.f32 %v1386, 1.442695
    %v1388 = vpow.pop %v1387
    %v1389 = vadd.f32 %v1388, 1.0
    %v1390 = vrcp.pop %v1389
    %v1391 = vmul.f32 1.0, %v1390
    %v1392 = vtanh.pop %v1385
    %v1393 = vmul.f32 %v1391, %v1301
    %1395 = vrot.lane.b32.xlu0 %v1392, 64
    %v1396 = vpop.permute.xlu0 %1395
    %v1398 = vmul.f32 %v1391, %v1396
    %1400 = vrot.lane.b32.xlu0 %v1398, 32
    %v1401 = vpop.permute.xlu0 %1400
    %v1403 = vadd.f32 %v1393, %v1401
    %v1404 = vtanh.pop %v1403
    %1406 = vrot.lane.b32.xlu0 %v1404, 64
    %v1407 = vpop.permute.xlu0 %1406
    %v1409 = vmul.f32 %v1391, %v1407
    %v1410 = vld [vmem:[#allocation12] sm:$0xff]
    %v1411 = vld [vmem:[#allocation12 + $0x8] sm:$0xff]
    %v1412 = vld [vmem:[#allocation12 + $0x10] sm:$0xff]
    %v1413 = vld [vmem:[#allocation12 + $0x18] sm:$0xff]
    %v1414 = vld [vmem:[%s9] sm:$0x1]
    %v1416 = vlaneseq
    %v1417 = vshrl.u32 %v1416, 7
    %v1418 = vsub.s32 0, %v1417
    %v1419 = vrot.slane %v1414, %v1418
    %1422 = vrot.lane.b32.xlu0 %v1409, 32
    %v1423 = vpop.permute.xlu0 %1422
    %v1424 = vsel %vm307, %v1423, 0
    %1426 = vmatprep.subr.mxu0 0.0
    %1427 = vmatpush1.msra.mxu0 0.0
    %1428 = vmatprep.subr.mxu0 0.0
    %1429 = vmatpush1.msra.mxu0 0.0
    %1430 = vmatprep.subr.mxu0 0.0
    %1431 = vmatpush1.msra.mxu0 0.0
    %1432 = vmatprep.subr.mxu0 0.0
    %1433 = vmatpush1.msra.mxu0 0.0
    %1434 = vmatprep.subr.mxu0 0.0
    %1435 = vmatpush1.msra.mxu0 0.0
    %1436 = vmatprep.subr.mxu0 0.0
    %1437 = vmatpush1.msra.mxu0 0.0
    %1438 = vmatprep.subr.mxu0 0.0
    %1439 = vmatpush1.msra.mxu0 0.0
    %1440 = vmatprep.subr.mxu0 0.0
    %1441 = vmatpush1.msra.mxu0 0.0
    %1442 = vmatprep.subr.mxu0 0.0
    %1443 = vmatpush1.msra.mxu0 0.0
    %1444 = vmatprep.subr.mxu0 0.0
    %1445 = vmatpush1.msra.mxu0 0.0
    %1446 = vmatprep.subr.mxu0 0.0
    %1447 = vmatpush1.msra.mxu0 0.0
    %1448 = vmatprep.subr.mxu0 0.0
    %1449 = vmatpush1.msra.mxu0 0.0
    %1450 = vmatprep.subr.mxu0 0.0
    %1451 = vmatpush1.msra.mxu0 %v1413
    %1452 = vmatprep.subr.mxu0 0.0
    %1453 = vmatpush1.msra.mxu0 %v1412
    %1454 = vmatprep.subr.mxu0 0.0
    %1455 = vmatpush1.msra.mxu0 %v1411
    %1456 = vmatprep.subr.mxu0 0.0
    %1457 = vmatpush1.msra.mxu0 %v1410
    %1458 = vmatprep.subr.mxu0 0.0
    %1459 = vmatpush2.msra.mxu0 0.0
    %1460 = vmatprep.subr.mxu0 0.0
    %1461 = vmatpush2.msra.mxu0 0.0
    %1462 = vmatprep.subr.mxu0 0.0
    %1463 = vmatpush2.msra.mxu0 0.0
    %1464 = vmatprep.subr.mxu0 0.0
    %1465 = vmatpush2.msra.mxu0 0.0
    %1466 = vmatprep.subr.mxu0 0.0
    %1467 = vmatpush2.msra.mxu0 0.0
    %1468 = vmatprep.subr.mxu0 0.0
    %1469 = vmatpush2.msra.mxu0 0.0
    %1470 = vmatprep.subr.mxu0 0.0
    %1471 = vmatpush2.msra.mxu0 0.0
    %1472 = vmatprep.subr.mxu0 0.0
    %1473 = vmatpush2.msra.mxu0 0.0
    %1474 = vmatprep.subr.mxu0 0.0
    %1475 = vmatpush2.msra.mxu0 0.0
    %1476 = vmatprep.subr.mxu0 0.0
    %1477 = vmatpush2.msra.mxu0 0.0
    %1478 = vmatprep.subr.mxu0 0.0
    %1479 = vmatpush2.msra.mxu0 0.0
    %1480 = vmatprep.subr.mxu0 0.0
    %1481 = vmatpush2.msra.mxu0 0.0
    %1482 = vmatprep.subr.mxu0 0.0
    %1483 = vmatpush2.msra.mxu0 0.0
    %1484 = vmatprep.subr.mxu0 0.0
    %1485 = vmatpush2.msra.mxu0 0.0
    %1486 = vmatprep.subr.mxu0 0.0
    %1487 = vmatpush2.msra.mxu0 0.0
    %1488 = vmatprep.subr.mxu0 0.0
    %1489 = vmatpush2.msra.mxu0 0.0
    %1490 = vmatprep.mubr.f32.mxu0 0.0
    %1491 = vmatmul.mubr.f32.gmra.mxu0 %v1424
    %v1492 = vpop.f32.mrf.mxu0
    %v1493 = vadd.f32 %v1419, %v1492
    %v1494 = vpop.f32.mrf.mxu0
    %1495 = vdwg.mxu0
    %v1496 = vmax.f32 %v1493, 0.0
    %v1497 = vld [vmem:[#allocation14] sm:$0xff]
    %v1498 = vld [vmem:[#allocation14 + $0x8] sm:$0xff]
    %v1499 = vld [vmem:[#allocation14 + $0x10] sm:$0xff]
    %v1500 = vld [vmem:[#allocation14 + $0x18] sm:$0xff]
    %v1501 = vld [vmem:[%s11] sm:$0x1]
    %v1503 = vlaneseq
    %v1504 = vshrl.u32 %v1503, 7
    %v1505 = vsub.s32 0, %v1504
    %v1506 = vrot.slane %v1501, %v1505
    %v1509 = vsel %vm307, %v1496, 0
    %1511 = vmatprep.subr.mxu0 0.0
    %1512 = vmatpush1.msra.mxu0 0.0
    %1513 = vmatprep.subr.mxu0 0.0
    %1514 = vmatpush1.msra.mxu0 0.0
    %1515 = vmatprep.subr.mxu0 0.0
    %1516 = vmatpush1.msra.mxu0 0.0
    %1517 = vmatprep.subr.mxu0 0.0
    %1518 = vmatpush1.msra.mxu0 0.0
    %1519 = vmatprep.subr.mxu0 0.0
    %1520 = vmatpush1.msra.mxu0 0.0
    %1521 = vmatprep.subr.mxu0 0.0
    %1522 = vmatpush1.msra.mxu0 0.0
    %1523 = vmatprep.subr.mxu0 0.0
    %1524 = vmatpush1.msra.mxu0 0.0
    %1525 = vmatprep.subr.mxu0 0.0
    %1526 = vmatpush1.msra.mxu0 0.0
    %1527 = vmatprep.subr.mxu0 0.0
    %1528 = vmatpush1.msra.mxu0 0.0
    %1529 = vmatprep.subr.mxu0 0.0
    %1530 = vmatpush1.msra.mxu0 0.0
    %1531 = vmatprep.subr.mxu0 0.0
    %1532 = vmatpush1.msra.mxu0 0.0
    %1533 = vmatprep.subr.mxu0 0.0
    %1534 = vmatpush1.msra.mxu0 0.0
    %1535 = vmatprep.subr.mxu0 0.0
    %1536 = vmatpush1.msra.mxu0 %v1500
    %1537 = vmatprep.subr.mxu0 0.0
    %1538 = vmatpush1.msra.mxu0 %v1499
    %1539 = vmatprep.subr.mxu0 0.0
    %1540 = vmatpush1.msra.mxu0 %v1498
    %1541 = vmatprep.subr.mxu0 0.0
    %1542 = vmatpush1.msra.mxu0 %v1497
    %1543 = vmatprep.subr.mxu0 0.0
    %1544 = vmatpush2.msra.mxu0 0.0
    %1545 = vmatprep.subr.mxu0 0.0
    %1546 = vmatpush2.msra.mxu0 0.0
    %1547 = vmatprep.subr.mxu0 0.0
    %1548 = vmatpush2.msra.mxu0 0.0
    %1549 = vmatprep.subr.mxu0 0.0
    %1550 = vmatpush2.msra.mxu0 0.0
    %1551 = vmatprep.subr.mxu0 0.0
    %1552 = vmatpush2.msra.mxu0 0.0
    %1553 = vmatprep.subr.mxu0 0.0
    %1554 = vmatpush2.msra.mxu0 0.0
    %1555 = vmatprep.subr.mxu0 0.0
    %1556 = vmatpush2.msra.mxu0 0.0
    %1557 = vmatprep.subr.mxu0 0.0
    %1558 = vmatpush2.msra.mxu0 0.0
    %1559 = vmatprep.subr.mxu0 0.0
    %1560 = vmatpush2.msra.mxu0 0.0
    %1561 = vmatprep.subr.mxu0 0.0
    %1562 = vmatpush2.msra.mxu0 0.0
    %1563 = vmatprep.subr.mxu0 0.0
    %1564 = vmatpush2.msra.mxu0 0.0
    %1565 = vmatprep.subr.mxu0 0.0
    %1566 = vmatpush2.msra.mxu0 0.0
    %1567 = vmatprep.subr.mxu0 0.0
    %1568 = vmatpush2.msra.mxu0 0.0
    %1569 = vmatprep.subr.mxu0 0.0
    %1570 = vmatpush2.msra.mxu0 0.0
    %1571 = vmatprep.subr.mxu0 0.0
    %1572 = vmatpush2.msra.mxu0 0.0
    %1573 = vmatprep.subr.mxu0 0.0
    %1574 = vmatpush2.msra.mxu0 0.0
    %1575 = vmatprep.mubr.f32.mxu0 0.0
    %1576 = vmatmul.mubr.f32.gmra.mxu0 %v1509
    %v1577 = vpop.f32.mrf.mxu0
    %v1578 = vadd.f32 %v1506, %v1577
    %v1579 = vpop.f32.mrf.mxu0
    %1580 = vdwg.mxu0
    %v1581 = vxor.u32 %v1578, 2147483648
    %v1582 = vmul.f32 %v1581, 1.442695
    %v1583 = vpow.pop %v1582
    %v1584 = vadd.f32 %v1583, 1.0
    %v1585 = vrcp.pop %v1584
    %v1586 = vmul.f32 1.0, %v1585
    %1587 = vst [vmem:[#allocation15] sm:$0xff] %v1586
    // Predicated region
    $region78: #{tpu_custom_call.1} parent=1 // pred_check
      _
    $region79: #{tpu_custom_call.1} parent=1 // pred_check_branch
      %1589 = sbr.rel (0) target = $region81
    $region80: #{tpu_custom_call.1} parent=1 // pred_region
      %s1591 = ssub.s32 128, 128
      %1592 = vsyncadd [#allocation5], %s1591
      %s1594 = sshll.u32 [#allocation15], 4
      %s1595 = int_to_ptr.vmem [resolvable:$true] %s1594
      %1597 = dma.vmem_to_hbm [thread:$0]  %s1595, 128, %s12, [#allocation5]
    $region81: #{tpu_custom_call.1} parent=1 // pred_fallthru
      _
    // Predicated region
    $region82: #{tpu_custom_call.1} parent=1 // pred_check
      _
    $region83: #{tpu_custom_call.1} parent=1 // pred_check_branch
      %1599 = sbr.rel (0) target = $region85
    $region84: #{tpu_custom_call.1} parent=1 // pred_region
      %1600 = dma.done [#allocation5], 128
    $region85: #{tpu_custom_call.1} parent=1 // pred_fallthru
      _
    %1601 = vsyncpa [#allocation4], 1
    %1602 = vsyncpa [#allocation7], 1
    %1603 = vsyncpa [#allocation10], 1
    %1604 = vsyncpa [#allocation13], 1
    %1605 = vsyncpa [#allocation5], 1

</llo_original>
